<compile_context>
chip_gen: v7x
topology: tpu7x:2x2x1
jax: 0.10.0
libtpu: 0.0.40
codegen_flags: <defaults>
</compile_context>

<pallas_src>
import functools

import jax
import jax.numpy as jnp
import numpy as np
from jax import lax
from jax.experimental import pallas as pl
from jax.experimental.pallas import tpu as pltpu

NEG = float("-inf")


# ----------------------------------------------------------------------------
# Fused SPPF kernel (one grid step == one batch element)
# ----------------------------------------------------------------------------
def _sppf_kernel(x_ref, w1_ref, b1_ref, w2_ref, b2_ref, o_ref, *, H, W, M):
    # x_ref:  (Cin, M)  bf16   one batch, channels-first, spatial flattened+padded
    # w1_ref: (c_, Cin) bf16   folded conv1x1 + BN weight of the first CBL
    # b1_ref: (c_, 1)   f32    folded BN bias of the first CBL
    # w2_ref: (4, Cout, c_) bf16  last-CBL weight split into the 4 concat chunks
    # b2_ref: (Cout, 1) f32
    # o_ref:  (Cout, M)        lane-dense output (M = pad128(H*W))
    f32 = jnp.float32
    bf16 = jnp.bfloat16
    HW = H * W

    # ---- first CBL: 1x1 conv (bf16 matmul, f32 acc) + folded-BN bias + SiLU
    a1 = jnp.dot(w1_ref[...], x_ref[...], preferred_element_type=f32)   # (c_, M)
    a1 = a1 + b1_ref[...]
    y = a1 * jax.nn.sigmoid(a1)                                         # SiLU, f32

    # ---- hoisted boundary masks for the separable 5x5/s1/p2 max pool -------
    # For every static roll shift `s`, the additive -inf mask is derived from
    # the *actual* source index produced by that same shift (rolled iota), so
    # it is correct independently of the roll direction convention.
    idx = lax.broadcasted_iota(jnp.int32, (1, M), 1).astype(f32)        # flat idx
    row = jnp.floor(idx / float(W))                                     # exact here

    def _mask(shift, dist, col_pass):
        src = pltpu.roll(idx, shift, axis=1)                            # source idx
        ok = jnp.abs(src - idx) == float(dist)                          # no wrap
        if col_pass:
            ok = jnp.logical_and(ok, src < float(HW))                   # valid row
        else:
            ok = jnp.logical_and(ok, pltpu.roll(row, shift, axis=1) == row)
        return jnp.where(ok, 0.0, NEG).astype(f32)                      # (1, M)

    row_taps = []                                  # along W: neighbors at +-1, +-2
    for d in (1, 2):
        for s in (d, M - d):                       # both directions, positive shift
            row_taps.append((s, _mask(s, d, col_pass=False)))
    col_taps = []                                  # along H: neighbors at +-W, +-2W
    for d in (W, 2 * W):
        if 0 < d < M:
            for s in (d, M - d):
                col_taps.append((s, _mask(s, d, col_pass=True)))

    def pool5(a):                                  # separable 5x5 max pool
        h = a                                      # row pass (within-row window)
        for s, m in row_taps:
            h = jnp.maximum(h, pltpu.roll(a, s, axis=1) + m)
        v = h                                      # column pass (whole-row shifts)
        for s, m in col_taps:
            v = jnp.maximum(v, pltpu.roll(h, s, axis=1) + m)
        return v

    # ---- fused concat + last CBL: 4 matmuls interleaved with the pool chain
    acc = jnp.dot(w2_ref[0], y.astype(bf16), preferred_element_type=f32)   # (Cout, M)
    p1 = pool5(y)
    acc = acc + jnp.dot(w2_ref[1], p1.astype(bf16), preferred_element_type=f32)
    p2 = pool5(p1)
    acc = acc + jnp.dot(w2_ref[2], p2.astype(bf16), preferred_element_type=f32)
    p3 = pool5(p2)
    acc = acc + jnp.dot(w2_ref[3], p3.astype(bf16), preferred_element_type=f32)

    a2 = acc + b2_ref[...]
    o_ref[...] = (a2 * jax.nn.sigmoid(a2)).astype(o_ref.dtype)


# ----------------------------------------------------------------------------
# Host-side wrapper
# ----------------------------------------------------------------------------
def sppf_forward(x_nchw, params):
    N, Cin, H, W = x_nchw.shape
    HW = H * W
    M = ((HW + 127) // 128) * 128                 # lane-dense spatial length

    w1 = params["w1"].astype(jnp.bfloat16)                # (c_, Cin)
    b1 = params["b1"].reshape(-1, 1).astype(jnp.float32)  # (c_, 1)
    w2c = params["w2_chunks"].astype(jnp.bfloat16)        # (4, Cout, c_)
    b2 = params["b2"].reshape(-1, 1).astype(jnp.float32)  # (Cout, 1)
    c_ = w1.shape[0]
    Cout = b2.shape[0]

    xf = x_nchw.reshape(N, Cin, HW)
    if M != HW:
        xf = jnp.pad(xf, ((0, 0), (0, 0), (0, M - HW)))
    xf = xf.astype(jnp.bfloat16)

    out_dtype = x_nchw.dtype
    out_bytes = jnp.dtype(out_dtype).itemsize

    # explicit scoped-VMEM budget: double-buffered x/out blocks + weights +
    # in-kernel f32 temporaries (y/p_k, accumulator, masks), with slack and a
    # floor at the platform default so small shapes never under-provision.
    io = 2 * Cin * M * 2 + 2 * Cout * M * out_bytes
    wts = 2 * (c_ * Cin * 2 + 4 * Cout * c_ * 2 + (c_ + Cout) * 4 * 128)
    tmp = (4 * c_ + Cout + 16) * M * 4
    vmem_limit = int(min(max(2 * (io + wts + tmp) + (4 << 20), 32 << 20), 100 << 20))

    flops = int(N * M * (2 * c_ * Cin + 2 * Cout * 4 * c_ + 3 * 16 * c_))
    transcendentals = int(N * M * (c_ + Cout))
    bytes_accessed = int(2 * N * Cin * M + out_bytes * N * Cout * M
                         + 2 * (c_ * Cin + 4 * Cout * c_) + 4 * (c_ + Cout))

    out = pl.pallas_call(
        functools.partial(_sppf_kernel, H=H, W=W, M=M),
        out_shape=jax.ShapeDtypeStruct((N, Cout, M), out_dtype),
        grid=(N,),
        in_specs=[
            pl.BlockSpec((None, Cin, M), lambda n: (n, 0, 0)),   # x, per batch
            # Weight/bias operands are grid-invariant (never re-fetched); the
            # default pipeline still double-buffers them, which is negligible
            # at these sizes.  TODO(synk): single-buffer via pipeline_mode for
            # production-scale weights.
            pl.BlockSpec((c_, Cin), lambda n: (0, 0)),           # w1
            pl.BlockSpec((c_, 1), lambda n: (0, 0)),             # b1
            pl.BlockSpec((4, Cout, c_), lambda n: (0, 0, 0)),    # w2 chunks
            pl.BlockSpec((Cout, 1), lambda n: (0, 0)),           # b2
        ],
        out_specs=pl.BlockSpec((None, Cout, M), lambda n: (n, 0, 0)),
        compiler_params=pltpu.CompilerParams(
            dimension_semantics=("parallel",),
            vmem_limit_bytes=vmem_limit),
        cost_estimate=pl.CostEstimate(
            flops=flops, transcendentals=transcendentals,
            bytes_accessed=bytes_accessed),
    )(xf, w1, b1, w2c, b2)

    out = out[:, :, :HW]
    return out.reshape(N, Cout, H, W)             # NCHW


# ----------------------------------------------------------------------------
# Deterministic parameters (Conv1x1 weight + BatchNorm folded, eps=1e-3)
# ----------------------------------------------------------------------------
def make_cbl_1x1(key, cin, cout, eps=1e-3):
    kw, kg, kb, km, kv = jax.random.split(key, 5)
    w = 0.2 * jax.random.normal(kw, (cout, cin), jnp.float32)
    gamma = 1.0 + 0.1 * jax.random.normal(kg, (cout,), jnp.float32)
    beta = 0.05 * jax.random.normal(kb, (cout,), jnp.float32)
    mean = 0.05 * jax.random.normal(km, (cout,), jnp.float32)
    var = 0.5 + jnp.abs(jax.random.normal(kv, (cout,), jnp.float32))
    scale = gamma / jnp.sqrt(var + eps)           # fold BN (inference mode)
    return w * scale[:, None], beta - mean * scale


def init_sppf(key, in_channels, out_channels):
    c_ = in_channels // 2
    k1, k2 = jax.random.split(key)
    w1, b1 = make_cbl_1x1(k1, in_channels, c_)
    w2, b2 = make_cbl_1x1(k2, 4 * c_, out_channels)
    w2_chunks = jnp.stack([w2[:, k * c_:(k + 1) * c_] for k in range(4)], 0)
    return dict(w1=w1, b1=b1, w2_full=w2, w2_chunks=w2_chunks, b2=b2)


# ----------------------------------------------------------------------------
# Pure-JAX reference (mirrors the PyTorch forward exactly, folded BN, f32)
# ----------------------------------------------------------------------------
def _pool5_ref(a):
    return lax.reduce_window(a, -jnp.inf, lax.max,
                             window_dimensions=(1, 1, 5, 5),
                             window_strides=(1, 1, 1, 1),
                             padding=((0, 0), (0, 0), (2, 2), (2, 2)))


def sppf_ref(x_nchw, params):
    w1, b1 = params["w1"], params["b1"]
    w2, b2 = params["w2_full"], params["b2"]
    y = jnp.einsum("oi,nihw->nohw", w1, x_nchw) + b1[None, :, None, None]
    y = y * jax.nn.sigmoid(y)
    p1 = _pool5_ref(y)
    p2 = _pool5_ref(p1)
    p3 = _pool5_ref(p2)
    cat = jnp.concatenate([y, p1, p2, p3], axis=1)
    o = jnp.einsum("oc,nchw->nohw", w2, cat) + b2[None, :, None, None]
    return o * jax.nn.sigmoid(o)


# ----------------------------------------------------------------------------
if __name__ == "__main__":
    key = jax.random.PRNGKey(0)
    kx, kp = jax.random.split(key)

    in_channels, out_channels = 4, 8
    x = jax.random.normal(kx, (2, in_channels, 16, 16), jnp.float32)
    params = init_sppf(kp, in_channels, out_channels)

    out = jax.block_until_ready(jax.jit(sppf_forward)(x, params))
    ref = jax.block_until_ready(sppf_ref(x, params))

    assert out.shape == (2, out_channels, 16, 16), out.shape
    # bf16 MXU inputs -> loosened tolerance vs the f32 reference.
    np.testing.assert_allclose(np.asarray(out), np.asarray(ref),
                               rtol=2e-2, atol=3e-2)
    print("KERNEL_OK")
</pallas_src>

<mosaic_0001>
module attributes {stable_mosaic.version = 11 : i64} {
  func.func @_sppf_kernel(%arg0: i32, %arg1: memref<1x4x256xbf16, #tpu.memory_space<vmem>>, %arg2: memref<2x4xbf16, #tpu.memory_space<vmem>>, %arg3: memref<2x1xf32, #tpu.memory_space<vmem>>, %arg4: memref<4x8x2xbf16, #tpu.memory_space<vmem>>, %arg5: memref<8x1xf32, #tpu.memory_space<vmem>>, %arg6: memref<1x8x256xf32, #tpu.memory_space<vmem>>) attributes {dimension_semantics = [#tpu.dimension_semantics<parallel>], iteration_bounds = array<i64: 2>, scalar_prefetch = 0 : i64, scratch_operands = 0 : i64, tpu.core_type = #tpu.core_type<tc>, window_params = [{transform_indices = @transform_0, window_bounds = array<i64: 1, 4, 256>}, {pipeline_mode = #tpu.pipeline_mode<synchronous>, transform_indices = @transform_1, window_bounds = array<i64: 2, 4>}, {pipeline_mode = #tpu.pipeline_mode<synchronous>, transform_indices = @transform_2, window_bounds = array<i64: 2, 1>}, {pipeline_mode = #tpu.pipeline_mode<synchronous>, transform_indices = @transform_3, window_bounds = array<i64: 4, 8, 2>}, {pipeline_mode = #tpu.pipeline_mode<synchronous>, transform_indices = @transform_4, window_bounds = array<i64: 8, 1>}, {transform_indices = @transform_5, window_bounds = array<i64: 1, 8, 256>}]} {
    %c0 = arith.constant 0 : index
    %c0_0 = arith.constant 0 : index
    %0 = vector.load %arg2[%c0, %c0_0] : memref<2x4xbf16, #tpu.memory_space<vmem>>, vector<2x4xbf16>
    %c0_1 = arith.constant 0 : index
    %c0_2 = arith.constant 0 : index
    %c0_3 = arith.constant 0 : index
    %1 = vector.load %arg1[%c0_1, %c0_2, %c0_3] : memref<1x4x256xbf16, #tpu.memory_space<vmem>>, vector<1x4x256xbf16>
    %2 = vector.shape_cast %1 : vector<1x4x256xbf16> to vector<4x256xbf16>
    %cst = arith.constant dense<0.000000e+00> : vector<2x256xf32>
    %3 = tpu.matmul %0, %2, %cst {dimension_numbers = #tpu.dot_dimension_numbers<[1], [0], [0], [1], [0, 0, 1, 1], [], []>} : vector<2x4xbf16>, vector<4x256xbf16>, vector<2x256xf32> -> vector<2x256xf32>
    %c0_4 = arith.constant 0 : index
    %c0_5 = arith.constant 0 : index
    %4 = vector.load %arg3[%c0_4, %c0_5] : memref<2x1xf32, #tpu.memory_space<vmem>>, vector<2x1xf32>
    %5 = vector.broadcast %4 : vector<2x1xf32> to vector<2x256xf32>
    %6 = arith.addf %3, %5 : vector<2x256xf32>
    %7 = arith.negf %6 : vector<2x256xf32>
    %8 = math.exp %7 : vector<2x256xf32>
    %cst_6 = arith.constant 1.000000e+00 : f32
    %9 = vector.broadcast %cst_6 : f32 to vector<2x256xf32>
    %10 = arith.addf %9, %8 : vector<2x256xf32>
    %11 = arith.divf %9, %10 : vector<2x256xf32>
    %12 = arith.mulf %6, %11 : vector<2x256xf32>
    %13 = tpu.iota {dimensions = array<i32: 1>} : vector<1x256xi32>
    %14 = arith.sitofp %13 : vector<1x256xi32> to vector<1x256xf32>
    %cst_7 = arith.constant 1.600000e+01 : f32
    %15 = vector.broadcast %cst_7 : f32 to vector<1x256xf32>
    %16 = arith.divf %14, %15 : vector<1x256xf32>
    %17 = math.floor %16 : vector<1x256xf32>
    %c1_i32 = arith.constant 1 : i32
    %18 = tpu.dynamic_rotate %14 by %c1_i32 dim 1 : vector<1x256xf32>, i32 -> vector<1x256xf32>
    %19 = arith.subf %18, %14 : vector<1x256xf32>
    %20 = math.absf %19 : vector<1x256xf32>
    %cst_8 = arith.constant 1.000000e+00 : f32
    %21 = vector.broadcast %cst_8 : f32 to vector<1x256xf32>
    %22 = arith.cmpf oeq, %20, %21 : vector<1x256xf32>
    %c1_i32_9 = arith.constant 1 : i32
    %23 = tpu.dynamic_rotate %17 by %c1_i32_9 dim 1 : vector<1x256xf32>, i32 -> vector<1x256xf32>
    %24 = arith.cmpf oeq, %23, %17 : vector<1x256xf32>
    %25 = arith.andi %22, %24 : vector<1x256xi1>
    %cst_10 = arith.constant 0.000000e+00 : f32
    %cst_11 = arith.constant 0xFF800000 : f32
    %26 = vector.broadcast %cst_10 : f32 to vector<1x256xf32>
    %27 = vector.broadcast %cst_11 : f32 to vector<1x256xf32>
    %28 = arith.select %25, %26, %27 : vector<1x256xi1>, vector<1x256xf32>
    %c255_i32 = arith.constant 255 : i32
    %29 = tpu.dynamic_rotate %14 by %c255_i32 dim 1 : vector<1x256xf32>, i32 -> vector<1x256xf32>
    %30 = arith.subf %29, %14 : vector<1x256xf32>
    %31 = math.absf %30 : vector<1x256xf32>
    %cst_12 = arith.constant 1.000000e+00 : f32
    %32 = vector.broadcast %cst_12 : f32 to vector<1x256xf32>
    %33 = arith.cmpf oeq, %31, %32 : vector<1x256xf32>
    %c255_i32_13 = arith.constant 255 : i32
    %34 = tpu.dynamic_rotate %17 by %c255_i32_13 dim 1 : vector<1x256xf32>, i32 -> vector<1x256xf32>
    %35 = arith.cmpf oeq, %34, %17 : vector<1x256xf32>
    %36 = arith.andi %33, %35 : vector<1x256xi1>
    %cst_14 = arith.constant 0.000000e+00 : f32
    %cst_15 = arith.constant 0xFF800000 : f32
    %37 = vector.broadcast %cst_14 : f32 to vector<1x256xf32>
    %38 = vector.broadcast %cst_15 : f32 to vector<1x256xf32>
    %39 = arith.select %36, %37, %38 : vector<1x256xi1>, vector<1x256xf32>
    %c2_i32 = arith.constant 2 : i32
    %40 = tpu.dynamic_rotate %14 by %c2_i32 dim 1 : vector<1x256xf32>, i32 -> vector<1x256xf32>
    %41 = arith.subf %40, %14 : vector<1x256xf32>
    %42 = math.absf %41 : vector<1x256xf32>
    %cst_16 = arith.constant 2.000000e+00 : f32
    %43 = vector.broadcast %cst_16 : f32 to vector<1x256xf32>
    %44 = arith.cmpf oeq, %42, %43 : vector<1x256xf32>
    %c2_i32_17 = arith.constant 2 : i32
    %45 = tpu.dynamic_rotate %17 by %c2_i32_17 dim 1 : vector<1x256xf32>, i32 -> vector<1x256xf32>
    %46 = arith.cmpf oeq, %45, %17 : vector<1x256xf32>
    %47 = arith.andi %44, %46 : vector<1x256xi1>
    %cst_18 = arith.constant 0.000000e+00 : f32
    %cst_19 = arith.constant 0xFF800000 : f32
    %48 = vector.broadcast %cst_18 : f32 to vector<1x256xf32>
    %49 = vector.broadcast %cst_19 : f32 to vector<1x256xf32>
    %50 = arith.select %47, %48, %49 : vector<1x256xi1>, vector<1x256xf32>
    %c254_i32 = arith.constant 254 : i32
    %51 = tpu.dynamic_rotate %14 by %c254_i32 dim 1 : vector<1x256xf32>, i32 -> vector<1x256xf32>
    %52 = arith.subf %51, %14 : vector<1x256xf32>
    %53 = math.absf %52 : vector<1x256xf32>
    %cst_20 = arith.constant 2.000000e+00 : f32
    %54 = vector.broadcast %cst_20 : f32 to vector<1x256xf32>
    %55 = arith.cmpf oeq, %53, %54 : vector<1x256xf32>
    %c254_i32_21 = arith.constant 254 : i32
    %56 = tpu.dynamic_rotate %17 by %c254_i32_21 dim 1 : vector<1x256xf32>, i32 -> vector<1x256xf32>
    %57 = arith.cmpf oeq, %56, %17 : vector<1x256xf32>
    %58 = arith.andi %55, %57 : vector<1x256xi1>
    %cst_22 = arith.constant 0.000000e+00 : f32
    %cst_23 = arith.constant 0xFF800000 : f32
    %59 = vector.broadcast %cst_22 : f32 to vector<1x256xf32>
    %60 = vector.broadcast %cst_23 : f32 to vector<1x256xf32>
    %61 = arith.select %58, %59, %60 : vector<1x256xi1>, vector<1x256xf32>
    %c16_i32 = arith.constant 16 : i32
    %62 = tpu.dynamic_rotate %14 by %c16_i32 dim 1 : vector<1x256xf32>, i32 -> vector<1x256xf32>
    %63 = arith.subf %62, %14 : vector<1x256xf32>
    %64 = math.absf %63 : vector<1x256xf32>
    %cst_24 = arith.constant 1.600000e+01 : f32
    %65 = vector.broadcast %cst_24 : f32 to vector<1x256xf32>
    %66 = arith.cmpf oeq, %64, %65 : vector<1x256xf32>
    %cst_25 = arith.constant 2.560000e+02 : f32
    %67 = vector.broadcast %cst_25 : f32 to vector<1x256xf32>
    %68 = arith.cmpf olt, %62, %67 : vector<1x256xf32>
    %69 = arith.andi %66, %68 : vector<1x256xi1>
    %cst_26 = arith.constant 0.000000e+00 : f32
    %cst_27 = arith.constant 0xFF800000 : f32
    %70 = vector.broadcast %cst_26 : f32 to vector<1x256xf32>
    %71 = vector.broadcast %cst_27 : f32 to vector<1x256xf32>
    %72 = arith.select %69, %70, %71 : vector<1x256xi1>, vector<1x256xf32>
    %c240_i32 = arith.constant 240 : i32
    %73 = tpu.dynamic_rotate %14 by %c240_i32 dim 1 : vector<1x256xf32>, i32 -> vector<1x256xf32>
    %74 = arith.subf %73, %14 : vector<1x256xf32>
    %75 = math.absf %74 : vector<1x256xf32>
    %cst_28 = arith.constant 1.600000e+01 : f32
    %76 = vector.broadcast %cst_28 : f32 to vector<1x256xf32>
    %77 = arith.cmpf oeq, %75, %76 : vector<1x256xf32>
    %cst_29 = arith.constant 2.560000e+02 : f32
    %78 = vector.broadcast %cst_29 : f32 to vector<1x256xf32>
    %79 = arith.cmpf olt, %73, %78 : vector<1x256xf32>
    %80 = arith.andi %77, %79 : vector<1x256xi1>
    %cst_30 = arith.constant 0.000000e+00 : f32
    %cst_31 = arith.constant 0xFF800000 : f32
    %81 = vector.broadcast %cst_30 : f32 to vector<1x256xf32>
    %82 = vector.broadcast %cst_31 : f32 to vector<1x256xf32>
    %83 = arith.select %80, %81, %82 : vector<1x256xi1>, vector<1x256xf32>
    %c32_i32 = arith.constant 32 : i32
    %84 = tpu.dynamic_rotate %14 by %c32_i32 dim 1 : vector<1x256xf32>, i32 -> vector<1x256xf32>
    %85 = arith.subf %84, %14 : vector<1x256xf32>
    %86 = math.absf %85 : vector<1x256xf32>
    %cst_32 = arith.constant 3.200000e+01 : f32
    %87 = vector.broadcast %cst_32 : f32 to vector<1x256xf32>
    %88 = arith.cmpf oeq, %86, %87 : vector<1x256xf32>
    %cst_33 = arith.constant 2.560000e+02 : f32
    %89 = vector.broadcast %cst_33 : f32 to vector<1x256xf32>
    %90 = arith.cmpf olt, %84, %89 : vector<1x256xf32>
    %91 = arith.andi %88, %90 : vector<1x256xi1>
    %cst_34 = arith.constant 0.000000e+00 : f32
    %cst_35 = arith.constant 0xFF800000 : f32
    %92 = vector.broadcast %cst_34 : f32 to vector<1x256xf32>
    %93 = vector.broadcast %cst_35 : f32 to vector<1x256xf32>
    %94 = arith.select %91, %92, %93 : vector<1x256xi1>, vector<1x256xf32>
    %c224_i32 = arith.constant 224 : i32
    %95 = tpu.dynamic_rotate %14 by %c224_i32 dim 1 : vector<1x256xf32>, i32 -> vector<1x256xf32>
    %96 = arith.subf %95, %14 : vector<1x256xf32>
    %97 = math.absf %96 : vector<1x256xf32>
    %cst_36 = arith.constant 3.200000e+01 : f32
    %98 = vector.broadcast %cst_36 : f32 to vector<1x256xf32>
    %99 = arith.cmpf oeq, %97, %98 : vector<1x256xf32>
    %cst_37 = arith.constant 2.560000e+02 : f32
    %100 = vector.broadcast %cst_37 : f32 to vector<1x256xf32>
    %101 = arith.cmpf olt, %95, %100 : vector<1x256xf32>
    %102 = arith.andi %99, %101 : vector<1x256xi1>
    %cst_38 = arith.constant 0.000000e+00 : f32
    %cst_39 = arith.constant 0xFF800000 : f32
    %103 = vector.broadcast %cst_38 : f32 to vector<1x256xf32>
    %104 = vector.broadcast %cst_39 : f32 to vector<1x256xf32>
    %105 = arith.select %102, %103, %104 : vector<1x256xi1>, vector<1x256xf32>
    %c0_40 = arith.constant 0 : index
    %c0_41 = arith.constant 0 : index
    %c0_42 = arith.constant 0 : index
    %106 = vector.load %arg4[%c0_40, %c0_41, %c0_42] : memref<4x8x2xbf16, #tpu.memory_space<vmem>>, vector<1x8x2xbf16>
    %107 = vector.shape_cast %106 : vector<1x8x2xbf16> to vector<8x2xbf16>
    %108 = arith.truncf %12 : vector<2x256xf32> to vector<2x256xbf16>
    %cst_43 = arith.constant dense<0.000000e+00> : vector<8x256xf32>
    %109 = tpu.matmul %107, %108, %cst_43 {dimension_numbers = #tpu.dot_dimension_numbers<[1], [0], [0], [1], [0, 0, 1, 1], [], []>} : vector<8x2xbf16>, vector<2x256xbf16>, vector<8x256xf32> -> vector<8x256xf32>
    %c1_i32_44 = arith.constant 1 : i32
    %110 = tpu.dynamic_rotate %12 by %c1_i32_44 dim 1 : vector<2x256xf32>, i32 -> vector<2x256xf32>
    %111 = vector.broadcast %28 : vector<1x256xf32> to vector<2x256xf32>
    %112 = arith.addf %110, %111 : vector<2x256xf32>
    %113 = arith.maximumf %12, %112 : vector<2x256xf32>
    %c255_i32_45 = arith.constant 255 : i32
    %114 = tpu.dynamic_rotate %12 by %c255_i32_45 dim 1 : vector<2x256xf32>, i32 -> vector<2x256xf32>
    %115 = vector.broadcast %39 : vector<1x256xf32> to vector<2x256xf32>
    %116 = arith.addf %114, %115 : vector<2x256xf32>
    %117 = arith.maximumf %113, %116 : vector<2x256xf32>
    %c2_i32_46 = arith.constant 2 : i32
    %118 = tpu.dynamic_rotate %12 by %c2_i32_46 dim 1 : vector<2x256xf32>, i32 -> vector<2x256xf32>
    %119 = vector.broadcast %50 : vector<1x256xf32> to vector<2x256xf32>
    %120 = arith.addf %118, %119 : vector<2x256xf32>
    %121 = arith.maximumf %117, %120 : vector<2x256xf32>
    %c254_i32_47 = arith.constant 254 : i32
    %122 = tpu.dynamic_rotate %12 by %c254_i32_47 dim 1 : vector<2x256xf32>, i32 -> vector<2x256xf32>
    %123 = vector.broadcast %61 : vector<1x256xf32> to vector<2x256xf32>
    %124 = arith.addf %122, %123 : vector<2x256xf32>
    %125 = arith.maximumf %121, %124 : vector<2x256xf32>
    %c16_i32_48 = arith.constant 16 : i32
    %126 = tpu.dynamic_rotate %125 by %c16_i32_48 dim 1 : vector<2x256xf32>, i32 -> vector<2x256xf32>
    %127 = vector.broadcast %72 : vector<1x256xf32> to vector<2x256xf32>
    %128 = arith.addf %126, %127 : vector<2x256xf32>
    %129 = arith.maximumf %125, %128 : vector<2x256xf32>
    %c240_i32_49 = arith.constant 240 : i32
    %130 = tpu.dynamic_rotate %125 by %c240_i32_49 dim 1 : vector<2x256xf32>, i32 -> vector<2x256xf32>
    %131 = vector.broadcast %83 : vector<1x256xf32> to vector<2x256xf32>
    %132 = arith.addf %130, %131 : vector<2x256xf32>
    %133 = arith.maximumf %129, %132 : vector<2x256xf32>
    %c32_i32_50 = arith.constant 32 : i32
    %134 = tpu.dynamic_rotate %125 by %c32_i32_50 dim 1 : vector<2x256xf32>, i32 -> vector<2x256xf32>
    %135 = vector.broadcast %94 : vector<1x256xf32> to vector<2x256xf32>
    %136 = arith.addf %134, %135 : vector<2x256xf32>
    %137 = arith.maximumf %133, %136 : vector<2x256xf32>
    %c224_i32_51 = arith.constant 224 : i32
    %138 = tpu.dynamic_rotate %125 by %c224_i32_51 dim 1 : vector<2x256xf32>, i32 -> vector<2x256xf32>
    %139 = vector.broadcast %105 : vector<1x256xf32> to vector<2x256xf32>
    %140 = arith.addf %138, %139 : vector<2x256xf32>
    %141 = arith.maximumf %137, %140 : vector<2x256xf32>
    %c1 = arith.constant 1 : index
    %c0_52 = arith.constant 0 : index
    %c0_53 = arith.constant 0 : index
    %142 = vector.load %arg4[%c1, %c0_52, %c0_53] : memref<4x8x2xbf16, #tpu.memory_space<vmem>>, vector<1x8x2xbf16>
    %143 = vector.shape_cast %142 : vector<1x8x2xbf16> to vector<8x2xbf16>
    %144 = arith.truncf %141 : vector<2x256xf32> to vector<2x256xbf16>
    %cst_54 = arith.constant dense<0.000000e+00> : vector<8x256xf32>
    %145 = tpu.matmul %143, %144, %cst_54 {dimension_numbers = #tpu.dot_dimension_numbers<[1], [0], [0], [1], [0, 0, 1, 1], [], []>} : vector<8x2xbf16>, vector<2x256xbf16>, vector<8x256xf32> -> vector<8x256xf32>
    %146 = arith.addf %109, %145 : vector<8x256xf32>
    %c1_i32_55 = arith.constant 1 : i32
    %147 = tpu.dynamic_rotate %141 by %c1_i32_55 dim 1 : vector<2x256xf32>, i32 -> vector<2x256xf32>
    %148 = vector.broadcast %28 : vector<1x256xf32> to vector<2x256xf32>
    %149 = arith.addf %147, %148 : vector<2x256xf32>
    %150 = arith.maximumf %141, %149 : vector<2x256xf32>
    %c255_i32_56 = arith.constant 255 : i32
    %151 = tpu.dynamic_rotate %141 by %c255_i32_56 dim 1 : vector<2x256xf32>, i32 -> vector<2x256xf32>
    %152 = vector.broadcast %39 : vector<1x256xf32> to vector<2x256xf32>
    %153 = arith.addf %151, %152 : vector<2x256xf32>
    %154 = arith.maximumf %150, %153 : vector<2x256xf32>
    %c2_i32_57 = arith.constant 2 : i32
    %155 = tpu.dynamic_rotate %141 by %c2_i32_57 dim 1 : vector<2x256xf32>, i32 -> vector<2x256xf32>
    %156 = vector.broadcast %50 : vector<1x256xf32> to vector<2x256xf32>
    %157 = arith.addf %155, %156 : vector<2x256xf32>
    %158 = arith.maximumf %154, %157 : vector<2x256xf32>
    %c254_i32_58 = arith.constant 254 : i32
    %159 = tpu.dynamic_rotate %141 by %c254_i32_58 dim 1 : vector<2x256xf32>, i32 -> vector<2x256xf32>
    %160 = vector.broadcast %61 : vector<1x256xf32> to vector<2x256xf32>
    %161 = arith.addf %159, %160 : vector<2x256xf32>
    %162 = arith.maximumf %158, %161 : vector<2x256xf32>
    %c16_i32_59 = arith.constant 16 : i32
    %163 = tpu.dynamic_rotate %162 by %c16_i32_59 dim 1 : vector<2x256xf32>, i32 -> vector<2x256xf32>
    %164 = vector.broadcast %72 : vector<1x256xf32> to vector<2x256xf32>
    %165 = arith.addf %163, %164 : vector<2x256xf32>
    %166 = arith.maximumf %162, %165 : vector<2x256xf32>
    %c240_i32_60 = arith.constant 240 : i32
    %167 = tpu.dynamic_rotate %162 by %c240_i32_60 dim 1 : vector<2x256xf32>, i32 -> vector<2x256xf32>
    %168 = vector.broadcast %83 : vector<1x256xf32> to vector<2x256xf32>
    %169 = arith.addf %167, %168 : vector<2x256xf32>
    %170 = arith.maximumf %166, %169 : vector<2x256xf32>
    %c32_i32_61 = arith.constant 32 : i32
    %171 = tpu.dynamic_rotate %162 by %c32_i32_61 dim 1 : vector<2x256xf32>, i32 -> vector<2x256xf32>
    %172 = vector.broadcast %94 : vector<1x256xf32> to vector<2x256xf32>
    %173 = arith.addf %171, %172 : vector<2x256xf32>
    %174 = arith.maximumf %170, %173 : vector<2x256xf32>
    %c224_i32_62 = arith.constant 224 : i32
    %175 = tpu.dynamic_rotate %162 by %c224_i32_62 dim 1 : vector<2x256xf32>, i32 -> vector<2x256xf32>
    %176 = vector.broadcast %105 : vector<1x256xf32> to vector<2x256xf32>
    %177 = arith.addf %175, %176 : vector<2x256xf32>
    %178 = arith.maximumf %174, %177 : vector<2x256xf32>
    %c2 = arith.constant 2 : index
    %c0_63 = arith.constant 0 : index
    %c0_64 = arith.constant 0 : index
    %179 = vector.load %arg4[%c2, %c0_63, %c0_64] : memref<4x8x2xbf16, #tpu.memory_space<vmem>>, vector<1x8x2xbf16>
    %180 = vector.shape_cast %179 : vector<1x8x2xbf16> to vector<8x2xbf16>
    %181 = arith.truncf %178 : vector<2x256xf32> to vector<2x256xbf16>
    %cst_65 = arith.constant dense<0.000000e+00> : vector<8x256xf32>
    %182 = tpu.matmul %180, %181, %cst_65 {dimension_numbers = #tpu.dot_dimension_numbers<[1], [0], [0], [1], [0, 0, 1, 1], [], []>} : vector<8x2xbf16>, vector<2x256xbf16>, vector<8x256xf32> -> vector<8x256xf32>
    %183 = arith.addf %146, %182 : vector<8x256xf32>
    %c1_i32_66 = arith.constant 1 : i32
    %184 = tpu.dynamic_rotate %178 by %c1_i32_66 dim 1 : vector<2x256xf32>, i32 -> vector<2x256xf32>
    %185 = vector.broadcast %28 : vector<1x256xf32> to vector<2x256xf32>
    %186 = arith.addf %184, %185 : vector<2x256xf32>
    %187 = arith.maximumf %178, %186 : vector<2x256xf32>
    %c255_i32_67 = arith.constant 255 : i32
    %188 = tpu.dynamic_rotate %178 by %c255_i32_67 dim 1 : vector<2x256xf32>, i32 -> vector<2x256xf32>
    %189 = vector.broadcast %39 : vector<1x256xf32> to vector<2x256xf32>
    %190 = arith.addf %188, %189 : vector<2x256xf32>
    %191 = arith.maximumf %187, %190 : vector<2x256xf32>
    %c2_i32_68 = arith.constant 2 : i32
    %192 = tpu.dynamic_rotate %178 by %c2_i32_68 dim 1 : vector<2x256xf32>, i32 -> vector<2x256xf32>
    %193 = vector.broadcast %50 : vector<1x256xf32> to vector<2x256xf32>
    %194 = arith.addf %192, %193 : vector<2x256xf32>
    %195 = arith.maximumf %191, %194 : vector<2x256xf32>
    %c254_i32_69 = arith.constant 254 : i32
    %196 = tpu.dynamic_rotate %178 by %c254_i32_69 dim 1 : vector<2x256xf32>, i32 -> vector<2x256xf32>
    %197 = vector.broadcast %61 : vector<1x256xf32> to vector<2x256xf32>
    %198 = arith.addf %196, %197 : vector<2x256xf32>
    %199 = arith.maximumf %195, %198 : vector<2x256xf32>
    %c16_i32_70 = arith.constant 16 : i32
    %200 = tpu.dynamic_rotate %199 by %c16_i32_70 dim 1 : vector<2x256xf32>, i32 -> vector<2x256xf32>
    %201 = vector.broadcast %72 : vector<1x256xf32> to vector<2x256xf32>
    %202 = arith.addf %200, %201 : vector<2x256xf32>
    %203 = arith.maximumf %199, %202 : vector<2x256xf32>
    %c240_i32_71 = arith.constant 240 : i32
    %204 = tpu.dynamic_rotate %199 by %c240_i32_71 dim 1 : vector<2x256xf32>, i32 -> vector<2x256xf32>
    %205 = vector.broadcast %83 : vector<1x256xf32> to vector<2x256xf32>
    %206 = arith.addf %204, %205 : vector<2x256xf32>
    %207 = arith.maximumf %203, %206 : vector<2x256xf32>
    %c32_i32_72 = arith.constant 32 : i32
    %208 = tpu.dynamic_rotate %199 by %c32_i32_72 dim 1 : vector<2x256xf32>, i32 -> vector<2x256xf32>
    %209 = vector.broadcast %94 : vector<1x256xf32> to vector<2x256xf32>
    %210 = arith.addf %208, %209 : vector<2x256xf32>
    %211 = arith.maximumf %207, %210 : vector<2x256xf32>
    %c224_i32_73 = arith.constant 224 : i32
    %212 = tpu.dynamic_rotate %199 by %c224_i32_73 dim 1 : vector<2x256xf32>, i32 -> vector<2x256xf32>
    %213 = vector.broadcast %105 : vector<1x256xf32> to vector<2x256xf32>
    %214 = arith.addf %212, %213 : vector<2x256xf32>
    %215 = arith.maximumf %211, %214 : vector<2x256xf32>
    %c3 = arith.constant 3 : index
    %c0_74 = arith.constant 0 : index
    %c0_75 = arith.constant 0 : index
    %216 = vector.load %arg4[%c3, %c0_74, %c0_75] : memref<4x8x2xbf16, #tpu.memory_space<vmem>>, vector<1x8x2xbf16>
    %217 = vector.shape_cast %216 : vector<1x8x2xbf16> to vector<8x2xbf16>
    %218 = arith.truncf %215 : vector<2x256xf32> to vector<2x256xbf16>
    %cst_76 = arith.constant dense<0.000000e+00> : vector<8x256xf32>
    %219 = tpu.matmul %217, %218, %cst_76 {dimension_numbers = #tpu.dot_dimension_numbers<[1], [0], [0], [1], [0, 0, 1, 1], [], []>} : vector<8x2xbf16>, vector<2x256xbf16>, vector<8x256xf32> -> vector<8x256xf32>
    %220 = arith.addf %183, %219 : vector<8x256xf32>
    %c0_77 = arith.constant 0 : index
    %c0_78 = arith.constant 0 : index
    %221 = vector.load %arg5[%c0_77, %c0_78] : memref<8x1xf32, #tpu.memory_space<vmem>>, vector<8x1xf32>
    %222 = vector.broadcast %221 : vector<8x1xf32> to vector<8x256xf32>
    %223 = arith.addf %220, %222 : vector<8x256xf32>
    %224 = arith.negf %223 : vector<8x256xf32>
    %225 = math.exp %224 : vector<8x256xf32>
    %cst_79 = arith.constant 1.000000e+00 : f32
    %226 = vector.broadcast %cst_79 : f32 to vector<8x256xf32>
    %227 = arith.addf %226, %225 : vector<8x256xf32>
    %228 = arith.divf %226, %227 : vector<8x256xf32>
    %229 = arith.mulf %223, %228 : vector<8x256xf32>
    %c0_80 = arith.constant 0 : index
    %c0_81 = arith.constant 0 : index
    %c0_82 = arith.constant 0 : index
    %230 = vector.load %arg6[%c0_80, %c0_81, %c0_82] : memref<1x8x256xf32, #tpu.memory_space<vmem>>, vector<1x8x256xf32>
    %231 = vector.shape_cast %230 : vector<1x8x256xf32> to vector<8x256xf32>
    %232 = vector.shape_cast %229 : vector<8x256xf32> to vector<1x8x256xf32>
    tpu.vector_store %arg6[%c0_80, %c0_81, %c0_82], %232 {strides = array<i32>} : memref<1x8x256xf32, #tpu.memory_space<vmem>>, vector<1x8x256xf32>,
    return
  }
  func.func @transform_0(%arg0: i32) -> (i32, i32, i32) {
    %c0_i32 = arith.constant 0 : i32
    %c0_i32_0 = arith.constant 0 : i32
    %c0_i32_1 = arith.constant 0 : i32
    return %arg0, %c0_i32, %c0_i32_0 : i32, i32, i32
  }
  func.func @transform_1(%arg0: i32) -> (i32, i32) {
    %c0_i32 = arith.constant 0 : i32
    %c0_i32_0 = arith.constant 0 : i32
    %c0_i32_1 = arith.constant 0 : i32
    return %c0_i32, %c0_i32_0 : i32, i32
  }
  func.func @transform_2(%arg0: i32) -> (i32, i32) {
    %c0_i32 = arith.constant 0 : i32
    %c0_i32_0 = arith.constant 0 : i32
    %c0_i32_1 = arith.constant 0 : i32
    return %c0_i32, %c0_i32_0 : i32, i32
  }
  func.func @transform_3(%arg0: i32) -> (i32, i32, i32) {
    %c0_i32 = arith.constant 0 : i32
    %c0_i32_0 = arith.constant 0 : i32
    %c0_i32_1 = arith.constant 0 : i32
    %c0_i32_2 = arith.constant 0 : i32
    return %c0_i32, %c0_i32_0, %c0_i32_1 : i32, i32, i32
  }
  func.func @transform_4(%arg0: i32) -> (i32, i32) {
    %c0_i32 = arith.constant 0 : i32
    %c0_i32_0 = arith.constant 0 : i32
    %c0_i32_1 = arith.constant 0 : i32
    return %c0_i32, %c0_i32_0 : i32, i32
  }
  func.func @transform_5(%arg0: i32) -> (i32, i32, i32) {
    %c0_i32 = arith.constant 0 : i32
    %c0_i32_0 = arith.constant 0 : i32
    %c0_i32_1 = arith.constant 0 : i32
    return %arg0, %c0_i32, %c0_i32_0 : i32, i32, i32
  }
}

</mosaic_0001>

<llo_original>
// kernel: sppf_forward.1
$region0: #{sppf_forward.1}
  #allocation0 [shape = 'u32[]', space=smem, size = 0x4, offset = 0x4, fixed_abs, tag = 'smem constant byte address 0x4 - core index']
  #allocation1 [shape = 'u32[144,128]{1,0:T(1,128)}', space=vmem, size = 0x12000, scoped, tag = 'internal scratch']
  %s0 = inlined_call_operand.vmem [shape: bf16[2,4,256], index: 0, kind: input, shape index: {}]
  %s1 = inlined_call_operand.vmem [shape: bf16[2,4], index: 1, kind: input, shape index: {}]
  %s2 = inlined_call_operand.vmem [shape: f32[2,1], index: 2, kind: input, shape index: {}]
  %s3 = inlined_call_operand.vmem [shape: bf16[4,8,2], index: 3, kind: input, shape index: {}]
  %s4 = inlined_call_operand.vmem [shape: f32[8,1], index: 4, kind: input, shape index: {}]
  %s5 = inlined_call_operand.vmem [shape: f32[2,8,256], index: 5, kind: output, shape index: {}]
  %s6 = sld [smem:[#allocation0]]
  $region53: #{sppf_forward.1} parent=0
    _
  %s8 = ssub.s32 1, %s6
  %s9 = scalar_select 0, %s8, %s6
  loop: start=0, step=1, limit=4
  $region2: #{sppf_forward.1} parent=0 // loop_pre_header
    _
  $region3: #{sppf_forward.1} parent=0 // loop_header
    %s11 = sphi 0, %s15
    %p12 = scmp.ge.s32.totalorder %s11, 4
    %s21 = sphi 0, %s23
    %s24 = sphi 0, %s21
    %s25 = sphi 0, %s24
    %s41 = sphi 0, %s25
    %s45 = sphi 0, %s45
    %s47 = sphi 0, %s45
    %s48 = sphi 0, %s47
    %s62 = sphi 0, %s48
    %s66 = sphi 0, %s66
    %s68 = sphi 0, %s66
    %s69 = sphi 0, %s68
    %s83 = sphi 0, %s69
    %s87 = sphi 0, %s87
    %s89 = sphi 0, %s87
    %s90 = sphi 0, %s89
    %s104 = sphi 0, %s90
    %s108 = sphi 0, %s108
    %s110 = sphi 0, %s108
    %s111 = sphi 0, %s110
    %s125 = sphi 0, %s111
    %s131 = sphi 0, %s133
    %s134 = sphi 0, %s131
    %s135 = sphi 0, %s134
    %s151 = sphi 0, %s135
  $region4: #{sppf_forward.1} parent=0 // loop_header_branch
    %14 = sbr.rel (%p12) target = $region8
  $region5: #{sppf_forward.1} parent=0 // loop_body
    %s16 = ssub.s32 %s11, 1
    %s17 = ssub.s32 %s11, 2
    %s18 = sadd.s32 %s11, 1
    %s19 = ssub.s32 %s11, %s18
    %p20 = scmp.eq.s32.totalorder %s19, 0
    %s22 = sadd.s32 %s21, 1
    %s23 = scalar_select %p20, %s21, %s22
    %p26 = pneg %p20
    %p27 = scmp.eq.s32.totalorder %s11, 1
    %p28 = por %p26, %p27
    %p29 = scmp.ne.s32.totalorder %s21, %s24
    %p30 = scmp.eq.s32.totalorder %s11, 0
    %p31 = por %p29, %p30
    %p32 = scmp.ne.s32.totalorder %s21, %s24
    %p33 = scmp.eq.s32.totalorder %s16, 1
    %p34 = por %p32, %p33
    %p35 = scmp.ne.s32.totalorder %s24, %s25
    %p36 = scmp.eq.s32.totalorder %s16, 0
    %p37 = por %p35, %p36
    %p38 = scmp.ne.s32.totalorder %s24, %s25
    %p39 = scmp.eq.s32.totalorder %s17, 1
    %p40 = por %p38, %p39
    %p42 = scmp.ne.s32.totalorder %s25, %s41
    %p43 = scmp.eq.s32.totalorder %s17, 0
    %p44 = por %p42, %p43
    %s46 = sadd.s32 %s45, 1
    %p49 = scmp.eq.s32.totalorder %s11, 1
    %p50 = scmp.ne.s32.totalorder %s45, %s47
    %p51 = scmp.eq.s32.totalorder %s11, 0
    %p52 = por %p50, %p51
    %p53 = scmp.ne.s32.totalorder %s45, %s47
    %p54 = scmp.eq.s32.totalorder %s16, 1
    %p55 = por %p53, %p54
    %p56 = scmp.ne.s32.totalorder %s47, %s48
    %p57 = scmp.eq.s32.totalorder %s16, 0
    %p58 = por %p56, %p57
    %p59 = scmp.ne.s32.totalorder %s47, %s48
    %p60 = scmp.eq.s32.totalorder %s17, 1
    %p61 = por %p59, %p60
    %p63 = scmp.ne.s32.totalorder %s48, %s62
    %p64 = scmp.eq.s32.totalorder %s17, 0
    %p65 = por %p63, %p64
    %s67 = sadd.s32 %s66, 1
    %p70 = scmp.eq.s32.totalorder %s11, 1
    %p71 = scmp.ne.s32.totalorder %s66, %s68
    %p72 = scmp.eq.s32.totalorder %s11, 0
    %p73 = por %p71, %p72
    %p74 = scmp.ne.s32.totalorder %s66, %s68
    %p75 = scmp.eq.s32.totalorder %s16, 1
    %p76 = por %p74, %p75
    %p77 = scmp.ne.s32.totalorder %s68, %s69
    %p78 = scmp.eq.s32.totalorder %s16, 0
    %p79 = por %p77, %p78
    %p80 = scmp.ne.s32.totalorder %s68, %s69
    %p81 = scmp.eq.s32.totalorder %s17, 1
    %p82 = por %p80, %p81
    %p84 = scmp.ne.s32.totalorder %s69, %s83
    %p85 = scmp.eq.s32.totalorder %s17, 0
    %p86 = por %p84, %p85
    %s88 = sadd.s32 %s87, 1
    %p91 = scmp.eq.s32.totalorder %s11, 1
    %p92 = scmp.ne.s32.totalorder %s87, %s89
    %p93 = scmp.eq.s32.totalorder %s11, 0
    %p94 = por %p92, %p93
    %p95 = scmp.ne.s32.totalorder %s87, %s89
    %p96 = scmp.eq.s32.totalorder %s16, 1
    %p97 = por %p95, %p96
    %p98 = scmp.ne.s32.totalorder %s89, %s90
    %p99 = scmp.eq.s32.totalorder %s16, 0
    %p100 = por %p98, %p99
    %p101 = scmp.ne.s32.totalorder %s89, %s90
    %p102 = scmp.eq.s32.totalorder %s17, 1
    %p103 = por %p101, %p102
    %p105 = scmp.ne.s32.totalorder %s90, %s104
    %p106 = scmp.eq.s32.totalorder %s17, 0
    %p107 = por %p105, %p106
    %s109 = sadd.s32 %s108, 1
    %p112 = scmp.eq.s32.totalorder %s11, 1
    %p113 = scmp.ne.s32.totalorder %s108, %s110
    %p114 = scmp.eq.s32.totalorder %s11, 0
    %p115 = por %p113, %p114
    %p116 = scmp.ne.s32.totalorder %s108, %s110
    %p117 = scmp.eq.s32.totalorder %s16, 1
    %p118 = por %p116, %p117
    %p119 = scmp.ne.s32.totalorder %s110, %s111
    %p120 = scmp.eq.s32.totalorder %s16, 0
    %p121 = por %p119, %p120
    %p122 = scmp.ne.s32.totalorder %s110, %s111
    %p123 = scmp.eq.s32.totalorder %s17, 1
    %p124 = por %p122, %p123
    %p126 = scmp.ne.s32.totalorder %s111, %s125
    %p127 = scmp.eq.s32.totalorder %s17, 0
    %p128 = por %p126, %p127
    %s129 = ssub.s32 %s11, %s18
    %p130 = scmp.eq.s32.totalorder %s129, 0
    %s132 = sadd.s32 %s131, 1
    %s133 = scalar_select %p130, %s131, %s132
    %p136 = pneg %p130
    %p137 = scmp.eq.s32.totalorder %s11, 1
    %p138 = por %p136, %p137
    %p139 = scmp.ne.s32.totalorder %s131, %s134
    %p140 = scmp.eq.s32.totalorder %s11, 0
    %p141 = por %p139, %p140
    %p142 = scmp.ne.s32.totalorder %s131, %s134
    %p143 = scmp.eq.s32.totalorder %s16, 1
    %p144 = por %p142, %p143
    %p145 = scmp.ne.s32.totalorder %s134, %s135
    %p146 = scmp.eq.s32.totalorder %s16, 0
    %p147 = por %p145, %p146
    %p148 = scmp.ne.s32.totalorder %s134, %s135
    %p149 = scmp.eq.s32.totalorder %s17, 1
    %p150 = por %p148, %p149
    %p152 = scmp.ne.s32.totalorder %s135, %s151
    %p153 = scmp.eq.s32.totalorder %s17, 0
    %p154 = por %p152, %p153
    %p155 = scmp.le.s32.totalorder 1, %s11
    %p156 = scmp.lt.s32.totalorder %s11, 3
    %p157 = pnand %p155, %p156
    %p158 = pneg %p157
    // Predicated region
    $region9: #{sppf_forward.1} parent=5 // pred_check
      _
    $region10: #{sppf_forward.1} parent=5 // pred_check_branch
      %160 = sbr.rel (%p157) target = $region12
    $region11: #{sppf_forward.1} parent=5 // pred_region
      %s161 = ssub.s32 %s11, 1
      // Predicated region
      $region13: #{sppf_forward.1} parent=11 // pred_check
        %p162 = pneg %p58
      $region14: #{sppf_forward.1} parent=11 // pred_check_branch
        %164 = sbr.rel (%p162) target = $region16
      $region15: #{sppf_forward.1} parent=11 // pred_region
        _
      $region16: #{sppf_forward.1} parent=11 // pred_fallthru
        _
      // Predicated region
      $region17: #{sppf_forward.1} parent=11 // pred_check
        %p165 = pneg %p79
      $region18: #{sppf_forward.1} parent=11 // pred_check_branch
        %167 = sbr.rel (%p165) target = $region20
      $region19: #{sppf_forward.1} parent=11 // pred_region
        _
      $region20: #{sppf_forward.1} parent=11 // pred_fallthru
        _
      // Predicated region
      $region21: #{sppf_forward.1} parent=11 // pred_check
        %p168 = pneg %p100
      $region22: #{sppf_forward.1} parent=11 // pred_check_branch
        %170 = sbr.rel (%p168) target = $region24
      $region23: #{sppf_forward.1} parent=11 // pred_region
        _
      $region24: #{sppf_forward.1} parent=11 // pred_fallthru
        _
      // Predicated region
      $region25: #{sppf_forward.1} parent=11 // pred_check
        %p171 = pneg %p121
      $region26: #{sppf_forward.1} parent=11 // pred_check_branch
        %173 = sbr.rel (%p171) target = $region28
      $region27: #{sppf_forward.1} parent=11 // pred_region
        _
      $region28: #{sppf_forward.1} parent=11 // pred_fallthru
        _
    $region12: #{sppf_forward.1} parent=5 // pred_fallthru
      _
    %p174 = scmp.lt.s32.totalorder %s11, 2
    // Predicated region
    $region29: #{sppf_forward.1} parent=5 // pred_check
      %p175 = pneg %p174
    $region30: #{sppf_forward.1} parent=5 // pred_check_branch
      %177 = sbr.rel (%p175) target = $region32
    $region31: #{sppf_forward.1} parent=5 // pred_region
      // Predicated region
      $region33: #{sppf_forward.1} parent=31 // pred_check
        %p178 = pneg %p31
      $region34: #{sppf_forward.1} parent=31 // pred_check_branch
        %180 = sbr.rel (%p178) target = $region36
      $region35: #{sppf_forward.1} parent=31 // pred_region
        %p181 = scmp.lt.s32.totalorder %s11, 1
        %s182 = scalar_select %p181, %s11, 1
        %s183 = smul.addr %s182, 2
        %s184 = smul.addr %s183, 2
        %s185 = scalar_lea.vmem %s0, %s184
      $region36: #{sppf_forward.1} parent=31 // pred_fallthru
        _
    $region32: #{sppf_forward.1} parent=5 // pred_fallthru
      _
    %p186 = scmp.le.s32.totalorder 1, %s11
    %p187 = scmp.lt.s32.totalorder %s11, 3
    %p188 = pnand %p186, %p187
    %p189 = pneg %p188
    // Predicated region
    $region37: #{sppf_forward.1} parent=5 // pred_check
      _
    $region38: #{sppf_forward.1} parent=5 // pred_check_branch
      %191 = sbr.rel (%p188) target = $region40
    $region39: #{sppf_forward.1} parent=5 // pred_region
      %s192 = ssub.s32 %s11, 1
      %p193 = scmp.lt.s32.totalorder %s16, 1
      %s194 = scalar_select %p193, %s16, 1
      %s195 = smul.addr %s194, 2
      %s196 = smul.addr %s195, 2
      %s197 = scalar_lea.vmem %s0, %s196
      %p198 = pneg %p37
      %p199 = pneg %p34
      %p200 = pneg %p58
      %p201 = pneg %p55
      %p202 = pneg %p79
      %p203 = pneg %p76
      %p204 = pneg %p100
      %p205 = pneg %p97
      %p206 = pneg %p121
      %p207 = pneg %p118
      %p208 = pneg %p147
      %p209 = pneg %p144
      %p210 = scmp.lt.s32.totalorder %s16, 1
      %s211 = scalar_select %p210, %s16, 1
      %s212 = smul.addr %s211, 2
      %s213 = smul.addr %s212, 8
      %s214 = scalar_lea.vmem %s5, %s213
      %p215 = scmp.lt.s32.totalorder %s16, 1
      %s216 = scalar_select %p215, %s16, 1
      %s217 = smul.addr %s216, 2
      %s218 = smul.addr %s217, 2
      %s219 = scalar_lea.vmem %s0, %s218
      %p220 = scmp.lt.s32.totalorder %s16, 1
      %s221 = scalar_select %p220, %s16, 1
      %s222 = smul.addr %s221, 2
      %s223 = smul.addr %s222, 8
      %s224 = scalar_lea.vmem %s5, %s223
      %v226 = vld [vmem:[%s1] sm:$0x1]
      %v227 = vld [vmem:[%s219] sm:$0xf]
      %v228 = vld [vmem:[%s2] sm:$0x3]
      %230 = vset.pattern.permute.xlu0 0
      %231 = vperm.xlu0 %230, %v228
      %v232 = vpop.permute.xlu0 %231
      %v236 = vunpack.c.l.s4 1983009808
      %v237 = vunpack.c.0.s8 %v236
      %v238 = vlaneseq
      %v239 = vshrl.u32 %v238, 7
      %v240 = vsub.s32 %v237, %v239
      %v241 = vrot.slane %v227, %v240
      %v242 = vcombine.high %v241, %v241
      %vm243 = vcmask 31744
      %v245 = vsel %vm243, %v226, 0
      %vm247 = vcmask 1041408
      %v249 = vsel %vm247, %v241, 0
      %v252 = vsel %vm247, %v242, 0
      %254 = vmatprep.subr.bf16.mxu0 %v252
      %255 = vmatpush1.bf16.msra.mxu0 %v249
      %256 = vmatprep.subr.bf16.mxu0 0
      %257 = vmatpush1.bf16.msra.mxu0 0
      %258 = vmatprep.subr.bf16.mxu0 0
      %259 = vmatpush1.bf16.msra.mxu0 0
      %260 = vmatprep.subr.bf16.mxu0 0
      %261 = vmatpush1.bf16.msra.mxu0 0
      %262 = vmatprep.subr.bf16.mxu0 0
      %263 = vmatpush1.bf16.msra.mxu0 0
      %264 = vmatprep.subr.bf16.mxu0 0
      %265 = vmatpush1.bf16.msra.mxu0 0
      %266 = vmatprep.subr.bf16.mxu0 0
      %267 = vmatpush1.bf16.msra.mxu0 0
      %268 = vmatprep.subr.bf16.mxu0 0
      %269 = vmatpush1.bf16.msra.mxu0 0
      %270 = vmatprep.subr.bf16.mxu0 0
      %271 = vmatpush1.bf16.msra.mxu0 0
      %272 = vmatprep.subr.bf16.mxu0 0
      %273 = vmatpush1.bf16.msra.mxu0 0
      %274 = vmatprep.subr.bf16.mxu0 0
      %275 = vmatpush1.bf16.msra.mxu0 0
      %276 = vmatprep.subr.bf16.mxu0 0
      %277 = vmatpush1.bf16.msra.mxu0 0
      %278 = vmatprep.subr.bf16.mxu0 0
      %279 = vmatpush1.bf16.msra.mxu0 0
      %280 = vmatprep.subr.bf16.mxu0 0
      %281 = vmatpush1.bf16.msra.mxu0 0
      %282 = vmatprep.subr.bf16.mxu0 0
      %283 = vmatpush1.bf16.msra.mxu0 0
      %284 = vmatprep.subr.bf16.mxu0 0
      %285 = vmatpush1.bf16.msra.mxu0 0
      %286 = vmatprep.mubr.bf16.mxu0 0
      %287 = vmatmul.mubr.bf16.gmra.mrb[0].mxu0 %v245
      %v288 = vpop.f32.mrb[0].mxu0
      %v289 = vadd.f32 %v232, %v288
      %v290 = vpop.f32.mrb[0].mxu0
      %v291 = vadd.f32 %v232, %v290
      %v292 = vpop.f32.mrb[0].mxu0
      %v293 = vpop.f32.mrb[0].mxu0
      %294 = vdwg.mxu0
      %v295 = vxor.u32 %v289, 2147483648
      %v296 = vxor.u32 %v291, 2147483648
      %v297 = vmul.f32 %v295, 1.442695
      %v298 = vpow.pop %v297
      %v299 = vmul.f32 %v296, 1.442695
      %v300 = vpow.pop %v299
      %v301 = vadd.f32 %v298, 1.0
      %v302 = vadd.f32 %v300, 1.0
      %v303 = vrcp.pop %v301
      %v304 = vmul.f32 1.0, %v303
      %v305 = vrcp.pop %v302
      %v306 = vmul.f32 1.0, %v305
      %v307 = vmul.f32 %v289, %v304
      %v308 = vmul.f32 %v291, %v306
      %v309 = vlaneseq
      %v310 = vand.u32 %v309, 127
      %v311 = vadd.s32 %v310, 128
      %v312 = vcvt.s32.f32 %v310
      %v313 = vcvt.s32.f32 %v311
      %v314 = vrcp.pop 16.0
      %v315 = vmul.f32 %v312, %v314
      %v316 = vmul.f32 %v313, %v314
      %v317 = vfloor.f32 %v315
      %v318 = vfloor.f32 %v316
      %319 = vrot.lane.b32.xlu0 %v312, 1
      %v320 = vpop.permute.xlu0 %319
      %321 = vrot.lane.b32.xlu0 %v313, 1
      %v322 = vpop.permute.xlu0 %321
      %vm323 = vcmp.lt.s32.totalorder %v310, 1
      %v324 = vsel %vm323, %v320, %v322
      %v325 = vsel %vm323, %v322, %v320
      %v326 = vsub.f32 %v325, %v312
      %v327 = vsub.f32 %v324, %v313
      %v328 = vand.u32 2147483647, %v326
      %v329 = vand.u32 2147483647, %v327
      %vm330 = vcmp.eq.f32.partialorder %v328, 1.0
      %vm331 = vcmp.eq.f32.partialorder %v329, 1.0
      %332 = vrot.lane.b32.xlu0 %v317, 1
      %v333 = vpop.permute.xlu0 %332
      %334 = vrot.lane.b32.xlu0 %v318, 1
      %v335 = vpop.permute.xlu0 %334
      %v336 = vsel %vm323, %v333, %v335
      %v337 = vsel %vm323, %v335, %v333
      %vm338 = vcmp.eq.f32.partialorder %v337, %v317
      %vm339 = vcmp.eq.f32.partialorder %v336, %v318
      %vm340 = vmand %vm330, %vm338
      %vm341 = vmand %vm331, %vm339
      %v342 = vsel %vm340, 0.0, -inf
      %v343 = vsel %vm341, 0.0, -inf
      %344 = vrot.lane.b32.xlu0 %v312, 127
      %v345 = vpop.permute.xlu0 %344
      %346 = vrot.lane.b32.xlu0 %v313, 127
      %v347 = vpop.permute.xlu0 %346
      %vm348 = vcmp.lt.s32.totalorder %v310, 127
      %v349 = vsel %vm348, %v345, %v347
      %v350 = vsel %vm348, %v347, %v345
      %v351 = vsub.f32 %v349, %v312
      %v352 = vsub.f32 %v350, %v313
      %v353 = vand.u32 2147483647, %v351
      %v354 = vand.u32 2147483647, %v352
      %vm355 = vcmp.eq.f32.partialorder %v353, 1.0
      %vm356 = vcmp.eq.f32.partialorder %v354, 1.0
      %357 = vrot.lane.b32.xlu0 %v317, 127
      %v358 = vpop.permute.xlu0 %357
      %359 = vrot.lane.b32.xlu0 %v318, 127
      %v360 = vpop.permute.xlu0 %359
      %v361 = vsel %vm348, %v358, %v360
      %v362 = vsel %vm348, %v360, %v358
      %vm363 = vcmp.eq.f32.partialorder %v361, %v317
      %vm364 = vcmp.eq.f32.partialorder %v362, %v318
      %vm365 = vmand %vm355, %vm363
      %vm366 = vmand %vm356, %vm364
      %v367 = vsel %vm365, 0.0, -inf
      %v368 = vsel %vm366, 0.0, -inf
      %369 = vrot.lane.b32.xlu0 %v312, 2
      %v370 = vpop.permute.xlu0 %369
      %371 = vrot.lane.b32.xlu0 %v313, 2
      %v372 = vpop.permute.xlu0 %371
      %vm373 = vcmp.lt.s32.totalorder %v310, 2
      %v374 = vsel %vm373, %v370, %v372
      %v375 = vsel %vm373, %v372, %v370
      %v376 = vsub.f32 %v375, %v312
      %v377 = vsub.f32 %v374, %v313
      %v378 = vand.u32 2147483647, %v376
      %v379 = vand.u32 2147483647, %v377
      %vm380 = vcmp.eq.f32.partialorder %v378, 2.0
      %vm381 = vcmp.eq.f32.partialorder %v379, 2.0
      %382 = vrot.lane.b32.xlu0 %v317, 2
      %v383 = vpop.permute.xlu0 %382
      %384 = vrot.lane.b32.xlu0 %v318, 2
      %v385 = vpop.permute.xlu0 %384
      %v386 = vsel %vm373, %v383, %v385
      %v387 = vsel %vm373, %v385, %v383
      %vm388 = vcmp.eq.f32.partialorder %v387, %v317
      %vm389 = vcmp.eq.f32.partialorder %v386, %v318
      %vm390 = vmand %vm380, %vm388
      %vm391 = vmand %vm381, %vm389
      %v392 = vsel %vm390, 0.0, -inf
      %v393 = vsel %vm391, 0.0, -inf
      %394 = vrot.lane.b32.xlu0 %v312, 126
      %v395 = vpop.permute.xlu0 %394
      %396 = vrot.lane.b32.xlu0 %v313, 126
      %v397 = vpop.permute.xlu0 %396
      %vm398 = vcmp.lt.s32.totalorder %v310, 126
      %v399 = vsel %vm398, %v395, %v397
      %v400 = vsel %vm398, %v397, %v395
      %v401 = vsub.f32 %v399, %v312
      %v402 = vsub.f32 %v400, %v313
      %v403 = vand.u32 2147483647, %v401
      %v404 = vand.u32 2147483647, %v402
      %vm405 = vcmp.eq.f32.partialorder %v403, 2.0
      %vm406 = vcmp.eq.f32.partialorder %v404, 2.0
      %407 = vrot.lane.b32.xlu0 %v317, 126
      %v408 = vpop.permute.xlu0 %407
      %409 = vrot.lane.b32.xlu0 %v318, 126
      %v410 = vpop.permute.xlu0 %409
      %v411 = vsel %vm398, %v408, %v410
      %v412 = vsel %vm398, %v410, %v408
      %vm413 = vcmp.eq.f32.partialorder %v411, %v317
      %vm414 = vcmp.eq.f32.partialorder %v412, %v318
      %vm415 = vmand %vm405, %vm413
      %vm416 = vmand %vm406, %vm414
      %v417 = vsel %vm415, 0.0, -inf
      %v418 = vsel %vm416, 0.0, -inf
      %419 = vrot.lane.b32.xlu0 %v312, 16
      %v420 = vpop.permute.xlu0 %419
      %421 = vrot.lane.b32.xlu0 %v313, 16
      %v422 = vpop.permute.xlu0 %421
      %vm423 = vcmp.lt.s32.totalorder %v310, 16
      %v424 = vsel %vm423, %v420, %v422
      %v425 = vsel %vm423, %v422, %v420
      %v426 = vsub.f32 %v425, %v312
      %v427 = vsub.f32 %v424, %v313
      %v428 = vand.u32 2147483647, %v426
      %v429 = vand.u32 2147483647, %v427
      %vm430 = vcmp.eq.f32.partialorder %v428, 16.0
      %vm431 = vcmp.eq.f32.partialorder %v429, 16.0
      %vm432 = vcmp.lt.f32.partialorder %v425, 256.0
      %vm433 = vcmp.lt.f32.partialorder %v424, 256.0
      %vm434 = vmand %vm430, %vm432
      %vm435 = vmand %vm431, %vm433
      %v436 = vsel %vm434, 0.0, -inf
      %v437 = vsel %vm435, 0.0, -inf
      %438 = vrot.lane.b32.xlu0 %v312, 112
      %v439 = vpop.permute.xlu0 %438
      %440 = vrot.lane.b32.xlu0 %v313, 112
      %v441 = vpop.permute.xlu0 %440
      %vm442 = vcmp.lt.s32.totalorder %v310, 112
      %v443 = vsel %vm442, %v439, %v441
      %v444 = vsel %vm442, %v441, %v439
      %v445 = vsub.f32 %v443, %v312
      %v446 = vsub.f32 %v444, %v313
      %v447 = vand.u32 2147483647, %v445
      %v448 = vand.u32 2147483647, %v446
      %vm449 = vcmp.eq.f32.partialorder %v447, 16.0
      %vm450 = vcmp.eq.f32.partialorder %v448, 16.0
      %vm451 = vcmp.lt.f32.partialorder %v443, 256.0
      %vm452 = vcmp.lt.f32.partialorder %v444, 256.0
      %vm453 = vmand %vm449, %vm451
      %vm454 = vmand %vm450, %vm452
      %v455 = vsel %vm453, 0.0, -inf
      %v456 = vsel %vm454, 0.0, -inf
      %457 = vrot.lane.b32.xlu0 %v312, 32
      %v458 = vpop.permute.xlu0 %457
      %459 = vrot.lane.b32.xlu0 %v313, 32
      %v460 = vpop.permute.xlu0 %459
      %vm461 = vcmp.lt.s32.totalorder %v310, 32
      %v462 = vsel %vm461, %v458, %v460
      %v463 = vsel %vm461, %v460, %v458
      %v464 = vsub.f32 %v463, %v312
      %v465 = vsub.f32 %v462, %v313
      %v466 = vand.u32 2147483647, %v464
      %v467 = vand.u32 2147483647, %v465
      %vm468 = vcmp.eq.f32.partialorder %v466, 32.0
      %vm469 = vcmp.eq.f32.partialorder %v467, 32.0
      %vm470 = vcmp.lt.f32.partialorder %v463, 256.0
      %vm471 = vcmp.lt.f32.partialorder %v462, 256.0
      %vm472 = vmand %vm468, %vm470
      %vm473 = vmand %vm469, %vm471
      %v474 = vsel %vm472, 0.0, -inf
      %v475 = vsel %vm473, 0.0, -inf
      %476 = vrot.lane.b32.xlu0 %v312, 96
      %v477 = vpop.permute.xlu0 %476
      %478 = vrot.lane.b32.xlu0 %v313, 96
      %v479 = vpop.permute.xlu0 %478
      %vm480 = vcmp.lt.s32.totalorder %v310, 96
      %v481 = vsel %vm480, %v477, %v479
      %v482 = vsel %vm480, %v479, %v477
      %v483 = vsub.f32 %v481, %v312
      %v484 = vsub.f32 %v482, %v313
      %v485 = vand.u32 2147483647, %v483
      %v486 = vand.u32 2147483647, %v484
      %vm487 = vcmp.eq.f32.partialorder %v485, 32.0
      %vm488 = vcmp.eq.f32.partialorder %v486, 32.0
      %vm489 = vcmp.lt.f32.partialorder %v481, 256.0
      %vm490 = vcmp.lt.f32.partialorder %v482, 256.0
      %vm491 = vmand %vm487, %vm489
      %vm492 = vmand %vm488, %vm490
      %v493 = vsel %vm491, 0.0, -inf
      %v494 = vsel %vm492, 0.0, -inf
      %v495 = vld [vmem:[%s3] sm:$0xf]
      %v496 = vpack.c.bf16 %v307, %v307
      %v497 = vpack.c.bf16 %v308, %v308
      %498 = vrot.lane.b32.xlu0 %v307, 1
      %v499 = vpop.permute.xlu0 %498
      %500 = vrot.lane.b32.xlu0 %v308, 1
      %v501 = vpop.permute.xlu0 %500
      %v502 = vsel %vm323, %v499, %v501
      %v503 = vsel %vm323, %v501, %v499
      %v504 = vlaneseq
      %v505 = vshrl.u32 %v504, 7
      %v506 = vsub.s32 0, %v505
      %v507 = vrot.slane %v342, %v506
      %v508 = vlaneseq
      %v509 = vshrl.u32 %v508, 7
      %v510 = vsub.s32 0, %v509
      %v511 = vrot.slane %v343, %v510
      %v512 = vadd.f32 %v503, %v507
      %v513 = vadd.f32 %v502, %v511
      %v514 = vmax.f32 %v307, %v512
      %v515 = vmax.f32 %v308, %v513
      %516 = vrot.lane.b32.xlu0 %v307, 127
      %v517 = vpop.permute.xlu0 %516
      %518 = vrot.lane.b32.xlu0 %v308, 127
      %v519 = vpop.permute.xlu0 %518
      %v520 = vsel %vm348, %v517, %v519
      %v521 = vsel %vm348, %v519, %v517
      %v522 = vlaneseq
      %v523 = vshrl.u32 %v522, 7
      %v524 = vsub.s32 0, %v523
      %v525 = vrot.slane %v367, %v524
      %v526 = vlaneseq
      %v527 = vshrl.u32 %v526, 7
      %v528 = vsub.s32 0, %v527
      %v529 = vrot.slane %v368, %v528
      %v530 = vadd.f32 %v520, %v525
      %v531 = vadd.f32 %v521, %v529
      %v532 = vmax.f32 %v514, %v530
      %v533 = vmax.f32 %v515, %v531
      %534 = vrot.lane.b32.xlu0 %v307, 2
      %v535 = vpop.permute.xlu0 %534
      %536 = vrot.lane.b32.xlu0 %v308, 2
      %v537 = vpop.permute.xlu0 %536
      %v538 = vsel %vm373, %v535, %v537
      %v539 = vsel %vm373, %v537, %v535
      %v540 = vlaneseq
      %v541 = vshrl.u32 %v540, 7
      %v542 = vsub.s32 0, %v541
      %v543 = vrot.slane %v392, %v542
      %v544 = vlaneseq
      %v545 = vshrl.u32 %v544, 7
      %v546 = vsub.s32 0, %v545
      %v547 = vrot.slane %v393, %v546
      %v548 = vadd.f32 %v539, %v543
      %v549 = vadd.f32 %v538, %v547
      %v550 = vmax.f32 %v532, %v548
      %v551 = vmax.f32 %v533, %v549
      %552 = vrot.lane.b32.xlu0 %v307, 126
      %v553 = vpop.permute.xlu0 %552
      %554 = vrot.lane.b32.xlu0 %v308, 126
      %v555 = vpop.permute.xlu0 %554
      %v556 = vsel %vm398, %v553, %v555
      %v557 = vsel %vm398, %v555, %v553
      %v558 = vlaneseq
      %v559 = vshrl.u32 %v558, 7
      %v560 = vsub.s32 0, %v559
      %v561 = vrot.slane %v417, %v560
      %v562 = vlaneseq
      %v563 = vshrl.u32 %v562, 7
      %v564 = vsub.s32 0, %v563
      %v565 = vrot.slane %v418, %v564
      %v566 = vadd.f32 %v556, %v561
      %v567 = vadd.f32 %v557, %v565
      %v568 = vmax.f32 %v550, %v566
      %v569 = vmax.f32 %v551, %v567
      %570 = vrot.lane.b32.xlu0 %v568, 16
      %v571 = vpop.permute.xlu0 %570
      %572 = vrot.lane.b32.xlu0 %v569, 16
      %v573 = vpop.permute.xlu0 %572
      %v574 = vsel %vm423, %v571, %v573
      %v575 = vsel %vm423, %v573, %v571
      %v576 = vlaneseq
      %v577 = vshrl.u32 %v576, 7
      %v578 = vsub.s32 0, %v577
      %v579 = vrot.slane %v436, %v578
      %v580 = vlaneseq
      %v581 = vshrl.u32 %v580, 7
      %v582 = vsub.s32 0, %v581
      %v583 = vrot.slane %v437, %v582
      %v584 = vadd.f32 %v575, %v579
      %v585 = vadd.f32 %v574, %v583
      %v586 = vmax.f32 %v568, %v584
      %v587 = vmax.f32 %v569, %v585
      %588 = vrot.lane.b32.xlu0 %v568, 112
      %v589 = vpop.permute.xlu0 %588
      %590 = vrot.lane.b32.xlu0 %v569, 112
      %v591 = vpop.permute.xlu0 %590
      %v592 = vsel %vm442, %v589, %v591
      %v593 = vsel %vm442, %v591, %v589
      %v594 = vlaneseq
      %v595 = vshrl.u32 %v594, 7
      %v596 = vsub.s32 0, %v595
      %v597 = vrot.slane %v455, %v596
      %v598 = vlaneseq
      %v599 = vshrl.u32 %v598, 7
      %v600 = vsub.s32 0, %v599
      %v601 = vrot.slane %v456, %v600
      %v602 = vadd.f32 %v592, %v597
      %v603 = vadd.f32 %v593, %v601
      %v604 = vmax.f32 %v586, %v602
      %v605 = vmax.f32 %v587, %v603
      %606 = vrot.lane.b32.xlu0 %v568, 32
      %v607 = vpop.permute.xlu0 %606
      %608 = vrot.lane.b32.xlu0 %v569, 32
      %v609 = vpop.permute.xlu0 %608
      %v610 = vsel %vm461, %v607, %v609
      %v611 = vsel %vm461, %v609, %v607
      %v612 = vlaneseq
      %v613 = vshrl.u32 %v612, 7
      %v614 = vsub.s32 0, %v613
      %v615 = vrot.slane %v474, %v614
      %v616 = vlaneseq
      %v617 = vshrl.u32 %v616, 7
      %v618 = vsub.s32 0, %v617
      %v619 = vrot.slane %v475, %v618
      %v620 = vadd.f32 %v611, %v615
      %v621 = vadd.f32 %v610, %v619
      %v622 = vmax.f32 %v604, %v620
      %v623 = vmax.f32 %v605, %v621
      %624 = vrot.lane.b32.xlu0 %v568, 96
      %v625 = vpop.permute.xlu0 %624
      %626 = vrot.lane.b32.xlu0 %v569, 96
      %v627 = vpop.permute.xlu0 %626
      %v628 = vsel %vm480, %v625, %v627
      %v629 = vsel %vm480, %v627, %v625
      %v630 = vlaneseq
      %v631 = vshrl.u32 %v630, 7
      %v632 = vsub.s32 0, %v631
      %v633 = vrot.slane %v493, %v632
      %v634 = vlaneseq
      %v635 = vshrl.u32 %v634, 7
      %v636 = vsub.s32 0, %v635
      %v637 = vrot.slane %v494, %v636
      %v638 = vadd.f32 %v628, %v633
      %v639 = vadd.f32 %v629, %v637
      %v640 = vmax.f32 %v622, %v638
      %v641 = vmax.f32 %v623, %v639
      %s642 = scalar_lea.vmem %s3, 4
      %v643 = vld [vmem:[%s642] sm:$0xf]
      %v644 = vpack.c.bf16 %v640, %v640
      %v645 = vpack.c.bf16 %v641, %v641
      %vm646 = vcmask 15360
      %v648 = vsel %vm646, %v643, 0
      %vm650 = vcmask 1040384
      %v652 = vsel %vm650, %v644, 0
      %v655 = vsel %vm650, %v645, 0
      %657 = vmatprep.subr.bf16.mxu0 %v655
      %658 = vmatpush1.bf16.msra.mxu0 %v652
      %659 = vmatprep.subr.bf16.mxu0 0
      %660 = vmatpush1.bf16.msra.mxu0 0
      %661 = vmatprep.subr.bf16.mxu0 0
      %662 = vmatpush1.bf16.msra.mxu0 0
      %663 = vmatprep.subr.bf16.mxu0 0
      %664 = vmatpush1.bf16.msra.mxu0 0
      %665 = vmatprep.subr.bf16.mxu0 0
      %666 = vmatpush1.bf16.msra.mxu0 0
      %667 = vmatprep.subr.bf16.mxu0 0
      %668 = vmatpush1.bf16.msra.mxu0 0
      %669 = vmatprep.subr.bf16.mxu0 0
      %670 = vmatpush1.bf16.msra.mxu0 0
      %671 = vmatprep.subr.bf16.mxu0 0
      %672 = vmatpush1.bf16.msra.mxu0 0
      %673 = vmatprep.subr.bf16.mxu0 0
      %674 = vmatpush1.bf16.msra.mxu0 0
      %675 = vmatprep.subr.bf16.mxu0 0
      %676 = vmatpush1.bf16.msra.mxu0 0
      %677 = vmatprep.subr.bf16.mxu0 0
      %678 = vmatpush1.bf16.msra.mxu0 0
      %679 = vmatprep.subr.bf16.mxu0 0
      %680 = vmatpush1.bf16.msra.mxu0 0
      %681 = vmatprep.subr.bf16.mxu0 0
      %682 = vmatpush1.bf16.msra.mxu0 0
      %683 = vmatprep.subr.bf16.mxu0 0
      %684 = vmatpush1.bf16.msra.mxu0 0
      %685 = vmatprep.subr.bf16.mxu0 0
      %686 = vmatpush1.bf16.msra.mxu0 0
      %687 = vmatprep.subr.bf16.mxu0 0
      %688 = vmatpush1.bf16.msra.mxu0 0
      %689 = vmatprep.mubr.bf16.mxu0 0
      %690 = vmatmul.mubr.bf16.gmra.mrb[0].mxu0 %v648
      %v691 = vpop.f32.mrb[0].mxu0
      %v692 = vadd.f32 0.0, %v691
      %v693 = vpop.f32.mrb[0].mxu0
      %v694 = vadd.f32 0.0, %v693
      %v695 = vpop.f32.mrb[0].mxu0
      %v696 = vpop.f32.mrb[0].mxu0
      %697 = vdwg.mxu0
      %v699 = vsel %vm646, %v495, 0
      %v702 = vsel %vm650, %v496, 0
      %v705 = vsel %vm650, %v497, 0
      %707 = vmatprep.subr.bf16.mxu0 %v705
      %708 = vmatpush1.bf16.msra.mxu0 %v702
      %709 = vmatprep.subr.bf16.mxu0 0
      %710 = vmatpush1.bf16.msra.mxu0 0
      %711 = vmatprep.subr.bf16.mxu0 0
      %712 = vmatpush1.bf16.msra.mxu0 0
      %713 = vmatprep.subr.bf16.mxu0 0
      %714 = vmatpush1.bf16.msra.mxu0 0
      %715 = vmatprep.subr.bf16.mxu0 0
      %716 = vmatpush1.bf16.msra.mxu0 0
      %717 = vmatprep.subr.bf16.mxu0 0
      %718 = vmatpush1.bf16.msra.mxu0 0
      %719 = vmatprep.subr.bf16.mxu0 0
      %720 = vmatpush1.bf16.msra.mxu0 0
      %721 = vmatprep.subr.bf16.mxu0 0
      %722 = vmatpush1.bf16.msra.mxu0 0
      %723 = vmatprep.subr.bf16.mxu0 0
      %724 = vmatpush1.bf16.msra.mxu0 0
      %725 = vmatprep.subr.bf16.mxu0 0
      %726 = vmatpush1.bf16.msra.mxu0 0
      %727 = vmatprep.subr.bf16.mxu0 0
      %728 = vmatpush1.bf16.msra.mxu0 0
      %729 = vmatprep.subr.bf16.mxu0 0
      %730 = vmatpush1.bf16.msra.mxu0 0
      %731 = vmatprep.subr.bf16.mxu0 0
      %732 = vmatpush1.bf16.msra.mxu0 0
      %733 = vmatprep.subr.bf16.mxu0 0
      %734 = vmatpush1.bf16.msra.mxu0 0
      %735 = vmatprep.subr.bf16.mxu0 0
      %736 = vmatpush1.bf16.msra.mxu0 0
      %737 = vmatprep.subr.bf16.mxu0 0
      %738 = vmatpush1.bf16.msra.mxu0 0
      %739 = vmatprep.mubr.bf16.mxu0 0
      %740 = vmatmul.mubr.bf16.gmra.mrb[0].mxu0 %v699
      %v741 = vpop.f32.mrb[0].mxu0
      %v742 = vadd.f32 %v692, %v741
      %v743 = vpop.f32.mrb[0].mxu0
      %v744 = vadd.f32 %v694, %v743
      %v745 = vpop.f32.mrb[0].mxu0
      %v746 = vpop.f32.mrb[0].mxu0
      %747 = vdwg.mxu0
      %748 = vrot.lane.b32.xlu0 %v640, 1
      %v749 = vpop.permute.xlu0 %748
      %750 = vrot.lane.b32.xlu0 %v641, 1
      %v751 = vpop.permute.xlu0 %750
      %v752 = vsel %vm323, %v749, %v751
      %v753 = vsel %vm323, %v751, %v749
      %v754 = vadd.f32 %v753, %v507
      %v755 = vadd.f32 %v752, %v511
      %v756 = vmax.f32 %v640, %v754
      %v757 = vmax.f32 %v641, %v755
      %758 = vrot.lane.b32.xlu0 %v640, 127
      %v759 = vpop.permute.xlu0 %758
      %760 = vrot.lane.b32.xlu0 %v641, 127
      %v761 = vpop.permute.xlu0 %760
      %v762 = vsel %vm348, %v759, %v761
      %v763 = vsel %vm348, %v761, %v759
      %v764 = vadd.f32 %v762, %v525
      %v765 = vadd.f32 %v763, %v529
      %v766 = vmax.f32 %v756, %v764
      %v767 = vmax.f32 %v757, %v765
      %768 = vrot.lane.b32.xlu0 %v640, 2
      %v769 = vpop.permute.xlu0 %768
      %770 = vrot.lane.b32.xlu0 %v641, 2
      %v771 = vpop.permute.xlu0 %770
      %v772 = vsel %vm373, %v769, %v771
      %v773 = vsel %vm373, %v771, %v769
      %v774 = vadd.f32 %v773, %v543
      %v775 = vadd.f32 %v772, %v547
      %v776 = vmax.f32 %v766, %v774
      %v777 = vmax.f32 %v767, %v775
      %778 = vrot.lane.b32.xlu0 %v640, 126
      %v779 = vpop.permute.xlu0 %778
      %780 = vrot.lane.b32.xlu0 %v641, 126
      %v781 = vpop.permute.xlu0 %780
      %v782 = vsel %vm398, %v779, %v781
      %v783 = vsel %vm398, %v781, %v779
      %v784 = vadd.f32 %v782, %v561
      %v785 = vadd.f32 %v783, %v565
      %v786 = vmax.f32 %v776, %v784
      %v787 = vmax.f32 %v777, %v785
      %788 = vrot.lane.b32.xlu0 %v786, 16
      %v789 = vpop.permute.xlu0 %788
      %790 = vrot.lane.b32.xlu0 %v787, 16
      %v791 = vpop.permute.xlu0 %790
      %v792 = vsel %vm423, %v789, %v791
      %v793 = vsel %vm423, %v791, %v789
      %v794 = vadd.f32 %v793, %v579
      %v795 = vadd.f32 %v792, %v583
      %v796 = vmax.f32 %v786, %v794
      %v797 = vmax.f32 %v787, %v795
      %798 = vrot.lane.b32.xlu0 %v786, 112
      %v799 = vpop.permute.xlu0 %798
      %800 = vrot.lane.b32.xlu0 %v787, 112
      %v801 = vpop.permute.xlu0 %800
      %v802 = vsel %vm442, %v799, %v801
      %v803 = vsel %vm442, %v801, %v799
      %v804 = vadd.f32 %v802, %v597
      %v805 = vadd.f32 %v803, %v601
      %v806 = vmax.f32 %v796, %v804
      %v807 = vmax.f32 %v797, %v805
      %808 = vrot.lane.b32.xlu0 %v786, 32
      %v809 = vpop.permute.xlu0 %808
      %810 = vrot.lane.b32.xlu0 %v787, 32
      %v811 = vpop.permute.xlu0 %810
      %v812 = vsel %vm461, %v809, %v811
      %v813 = vsel %vm461, %v811, %v809
      %v814 = vadd.f32 %v813, %v615
      %v815 = vadd.f32 %v812, %v619
      %v816 = vmax.f32 %v806, %v814
      %v817 = vmax.f32 %v807, %v815
      %818 = vrot.lane.b32.xlu0 %v786, 96
      %v819 = vpop.permute.xlu0 %818
      %820 = vrot.lane.b32.xlu0 %v787, 96
      %v821 = vpop.permute.xlu0 %820
      %v822 = vsel %vm480, %v819, %v821
      %v823 = vsel %vm480, %v821, %v819
      %v824 = vadd.f32 %v822, %v633
      %v825 = vadd.f32 %v823, %v637
      %v826 = vmax.f32 %v816, %v824
      %v827 = vmax.f32 %v817, %v825
      %s828 = scalar_lea.vmem %s3, 8
      %v829 = vld [vmem:[%s828] sm:$0xf]
      %v830 = vpack.c.bf16 %v826, %v826
      %v831 = vpack.c.bf16 %v827, %v827
      %v833 = vsel %vm646, %v829, 0
      %v836 = vsel %vm650, %v830, 0
      %v839 = vsel %vm650, %v831, 0
      %841 = vmatprep.subr.bf16.mxu0 %v839
      %842 = vmatpush1.bf16.msra.mxu0 %v836
      %843 = vmatprep.subr.bf16.mxu0 0
      %844 = vmatpush1.bf16.msra.mxu0 0
      %845 = vmatprep.subr.bf16.mxu0 0
      %846 = vmatpush1.bf16.msra.mxu0 0
      %847 = vmatprep.subr.bf16.mxu0 0
      %848 = vmatpush1.bf16.msra.mxu0 0
      %849 = vmatprep.subr.bf16.mxu0 0
      %850 = vmatpush1.bf16.msra.mxu0 0
      %851 = vmatprep.subr.bf16.mxu0 0
      %852 = vmatpush1.bf16.msra.mxu0 0
      %853 = vmatprep.subr.bf16.mxu0 0
      %854 = vmatpush1.bf16.msra.mxu0 0
      %855 = vmatprep.subr.bf16.mxu0 0
      %856 = vmatpush1.bf16.msra.mxu0 0
      %857 = vmatprep.subr.bf16.mxu0 0
      %858 = vmatpush1.bf16.msra.mxu0 0
      %859 = vmatprep.subr.bf16.mxu0 0
      %860 = vmatpush1.bf16.msra.mxu0 0
      %861 = vmatprep.subr.bf16.mxu0 0
      %862 = vmatpush1.bf16.msra.mxu0 0
      %863 = vmatprep.subr.bf16.mxu0 0
      %864 = vmatpush1.bf16.msra.mxu0 0
      %865 = vmatprep.subr.bf16.mxu0 0
      %866 = vmatpush1.bf16.msra.mxu0 0
      %867 = vmatprep.subr.bf16.mxu0 0
      %868 = vmatpush1.bf16.msra.mxu0 0
      %869 = vmatprep.subr.bf16.mxu0 0
      %870 = vmatpush1.bf16.msra.mxu0 0
      %871 = vmatprep.subr.bf16.mxu0 0
      %872 = vmatpush1.bf16.msra.mxu0 0
      %873 = vmatprep.mubr.bf16.mxu0 0
      %874 = vmatmul.mubr.bf16.gmra.mrb[0].mxu0 %v833
      %v875 = vpop.f32.mrb[0].mxu0
      %v876 = vadd.f32 0.0, %v875
      %v877 = vpop.f32.mrb[0].mxu0
      %v878 = vadd.f32 0.0, %v877
      %v879 = vpop.f32.mrb[0].mxu0
      %v880 = vpop.f32.mrb[0].mxu0
      %881 = vdwg.mxu0
      %v882 = vadd.f32 %v742, %v876
      %v883 = vadd.f32 %v744, %v878
      %884 = vrot.lane.b32.xlu0 %v826, 1
      %v885 = vpop.permute.xlu0 %884
      %886 = vrot.lane.b32.xlu0 %v827, 1
      %v887 = vpop.permute.xlu0 %886
      %v888 = vsel %vm323, %v885, %v887
      %v889 = vsel %vm323, %v887, %v885
      %v890 = vadd.f32 %v889, %v507
      %v891 = vadd.f32 %v888, %v511
      %v892 = vmax.f32 %v826, %v890
      %v893 = vmax.f32 %v827, %v891
      %894 = vrot.lane.b32.xlu0 %v826, 127
      %v895 = vpop.permute.xlu0 %894
      %896 = vrot.lane.b32.xlu0 %v827, 127
      %v897 = vpop.permute.xlu0 %896
      %v898 = vsel %vm348, %v895, %v897
      %v899 = vsel %vm348, %v897, %v895
      %v900 = vadd.f32 %v898, %v525
      %v901 = vadd.f32 %v899, %v529
      %v902 = vmax.f32 %v892, %v900
      %v903 = vmax.f32 %v893, %v901
      %904 = vrot.lane.b32.xlu0 %v826, 2
      %v905 = vpop.permute.xlu0 %904
      %906 = vrot.lane.b32.xlu0 %v827, 2
      %v907 = vpop.permute.xlu0 %906
      %v908 = vsel %vm373, %v905, %v907
      %v909 = vsel %vm373, %v907, %v905
      %v910 = vadd.f32 %v909, %v543
      %v911 = vadd.f32 %v908, %v547
      %v912 = vmax.f32 %v902, %v910
      %v913 = vmax.f32 %v903, %v911
      %914 = vrot.lane.b32.xlu0 %v826, 126
      %v915 = vpop.permute.xlu0 %914
      %916 = vrot.lane.b32.xlu0 %v827, 126
      %v917 = vpop.permute.xlu0 %916
      %v918 = vsel %vm398, %v915, %v917
      %v919 = vsel %vm398, %v917, %v915
      %v920 = vadd.f32 %v918, %v561
      %v921 = vadd.f32 %v919, %v565
      %v922 = vmax.f32 %v912, %v920
      %v923 = vmax.f32 %v913, %v921
      %924 = vrot.lane.b32.xlu0 %v922, 16
      %v925 = vpop.permute.xlu0 %924
      %926 = vrot.lane.b32.xlu0 %v923, 16
      %v927 = vpop.permute.xlu0 %926
      %v928 = vsel %vm423, %v925, %v927
      %v929 = vsel %vm423, %v927, %v925
      %v930 = vadd.f32 %v929, %v579
      %v931 = vadd.f32 %v928, %v583
      %v932 = vmax.f32 %v922, %v930
      %v933 = vmax.f32 %v923, %v931
      %934 = vrot.lane.b32.xlu0 %v922, 112
      %v935 = vpop.permute.xlu0 %934
      %936 = vrot.lane.b32.xlu0 %v923, 112
      %v937 = vpop.permute.xlu0 %936
      %v938 = vsel %vm442, %v935, %v937
      %v939 = vsel %vm442, %v937, %v935
      %v940 = vadd.f32 %v938, %v597
      %v941 = vadd.f32 %v939, %v601
      %v942 = vmax.f32 %v932, %v940
      %v943 = vmax.f32 %v933, %v941
      %944 = vrot.lane.b32.xlu0 %v922, 32
      %v945 = vpop.permute.xlu0 %944
      %946 = vrot.lane.b32.xlu0 %v923, 32
      %v947 = vpop.permute.xlu0 %946
      %v948 = vsel %vm461, %v945, %v947
      %v949 = vsel %vm461, %v947, %v945
      %v950 = vadd.f32 %v949, %v615
      %v951 = vadd.f32 %v948, %v619
      %v952 = vmax.f32 %v942, %v950
      %v953 = vmax.f32 %v943, %v951
      %954 = vrot.lane.b32.xlu0 %v922, 96
      %v955 = vpop.permute.xlu0 %954
      %956 = vrot.lane.b32.xlu0 %v923, 96
      %v957 = vpop.permute.xlu0 %956
      %v958 = vsel %vm480, %v955, %v957
      %v959 = vsel %vm480, %v957, %v955
      %v960 = vadd.f32 %v958, %v633
      %v961 = vadd.f32 %v959, %v637
      %v962 = vmax.f32 %v952, %v960
      %v963 = vmax.f32 %v953, %v961
      %s964 = scalar_lea.vmem %s3, 12
      %v965 = vld [vmem:[%s964] sm:$0xf]
      %v966 = vpack.c.bf16 %v962, %v962
      %v967 = vpack.c.bf16 %v963, %v963
      %v969 = vsel %vm646, %v965, 0
      %v972 = vsel %vm650, %v966, 0
      %v975 = vsel %vm650, %v967, 0
      %977 = vmatprep.subr.bf16.mxu0 %v975
      %978 = vmatpush1.bf16.msra.mxu0 %v972
      %979 = vmatprep.subr.bf16.mxu0 0
      %980 = vmatpush1.bf16.msra.mxu0 0
      %981 = vmatprep.subr.bf16.mxu0 0
      %982 = vmatpush1.bf16.msra.mxu0 0
      %983 = vmatprep.subr.bf16.mxu0 0
      %984 = vmatpush1.bf16.msra.mxu0 0
      %985 = vmatprep.subr.bf16.mxu0 0
      %986 = vmatpush1.bf16.msra.mxu0 0
      %987 = vmatprep.subr.bf16.mxu0 0
      %988 = vmatpush1.bf16.msra.mxu0 0
      %989 = vmatprep.subr.bf16.mxu0 0
      %990 = vmatpush1.bf16.msra.mxu0 0
      %991 = vmatprep.subr.bf16.mxu0 0
      %992 = vmatpush1.bf16.msra.mxu0 0
      %993 = vmatprep.subr.bf16.mxu0 0
      %994 = vmatpush1.bf16.msra.mxu0 0
      %995 = vmatprep.subr.bf16.mxu0 0
      %996 = vmatpush1.bf16.msra.mxu0 0
      %997 = vmatprep.subr.bf16.mxu0 0
      %998 = vmatpush1.bf16.msra.mxu0 0
      %999 = vmatprep.subr.bf16.mxu0 0
      %1000 = vmatpush1.bf16.msra.mxu0 0
      %1001 = vmatprep.subr.bf16.mxu0 0
      %1002 = vmatpush1.bf16.msra.mxu0 0
      %1003 = vmatprep.subr.bf16.mxu0 0
      %1004 = vmatpush1.bf16.msra.mxu0 0
      %1005 = vmatprep.subr.bf16.mxu0 0
      %1006 = vmatpush1.bf16.msra.mxu0 0
      %1007 = vmatprep.subr.bf16.mxu0 0
      %1008 = vmatpush1.bf16.msra.mxu0 0
      %1009 = vmatprep.mubr.bf16.mxu0 0
      %1010 = vmatmul.mubr.bf16.gmra.mrb[0].mxu0 %v969
      %v1011 = vpop.f32.mrb[0].mxu0
      %v1012 = vadd.f32 0.0, %v1011
      %v1013 = vpop.f32.mrb[0].mxu0
      %v1014 = vadd.f32 0.0, %v1013
      %v1015 = vpop.f32.mrb[0].mxu0
      %v1016 = vpop.f32.mrb[0].mxu0
      %1017 = vdwg.mxu0
      %v1018 = vadd.f32 %v882, %v1012
      %v1019 = vadd.f32 %v883, %v1014
      %v1020 = vld [vmem:[%s4] sm:$0xff]
      %1022 = vset.pattern.permute.xlu0 0
      %1023 = vperm.xlu0 %1022, %v1020
      %v1024 = vpop.permute.xlu0 %1023
      %v1026 = vadd.f32 %v1018, %v1024
      %v1027 = vadd.f32 %v1019, %v1024
      %v1028 = vxor.u32 %v1026, 2147483648
      %v1029 = vxor.u32 %v1027, 2147483648
      %v1030 = vmul.f32 %v1028, 1.442695
      %v1031 = vpow.pop %v1030
      %v1032 = vmul.f32 %v1029, 1.442695
      %v1033 = vpow.pop %v1032
      %v1034 = vadd.f32 %v1031, 1.0
      %v1035 = vadd.f32 %v1033, 1.0
      %v1036 = vrcp.pop %v1034
      %v1037 = vmul.f32 1.0, %v1036
      %v1038 = vrcp.pop %v1035
      %v1039 = vmul.f32 1.0, %v1038
      %v1040 = vmul.f32 %v1026, %v1037
      %v1041 = vmul.f32 %v1027, %v1039
      %1042 = vst [vmem:[%s224] sm:$0xff] %v1040
      %1043 = vst [vmem:[%s224 + $0x8] sm:$0xff] %v1041
      %p1044 = scmp.lt.s32.totalorder %s16, 1
      %s1045 = scalar_select %p1044, %s16, 1
      %s1046 = smul.addr %s1045, 2
      %s1047 = smul.addr %s1046, 8
      %s1048 = scalar_lea.vmem %s5, %s1047
      // Predicated region
      $region41: #{sppf_forward.1} parent=39 // pred_check
        %p1049 = pneg %p144
      $region42: #{sppf_forward.1} parent=39 // pred_check_branch
        %1051 = sbr.rel (%p1049) target = $region44
      $region43: #{sppf_forward.1} parent=39 // pred_region
        _
      $region44: #{sppf_forward.1} parent=39 // pred_fallthru
        _
    $region40: #{sppf_forward.1} parent=5 // pred_fallthru
      _
    %p1052 = scmp.le.s32.totalorder 2, %s11
    // Predicated region
    $region45: #{sppf_forward.1} parent=5 // pred_check
      %p1053 = pneg %p1052
    $region46: #{sppf_forward.1} parent=5 // pred_check_branch
      %1055 = sbr.rel (%p1053) target = $region48
    $region47: #{sppf_forward.1} parent=5 // pred_region
      %s1056 = ssub.s32 %s11, 2
      // Predicated region
      $region49: #{sppf_forward.1} parent=47 // pred_check
        %p1057 = pneg %p150
      $region50: #{sppf_forward.1} parent=47 // pred_check_branch
        %1059 = sbr.rel (%p1057) target = $region52
      $region51: #{sppf_forward.1} parent=47 // pred_region
        %p1060 = scmp.lt.s32.totalorder %s17, 1
        %s1061 = scalar_select %p1060, %s17, 1
        %s1062 = smul.addr %s1061, 2
        %s1063 = smul.addr %s1062, 8
        %s1064 = scalar_lea.vmem %s5, %s1063
      $region52: #{sppf_forward.1} parent=47 // pred_fallthru
        _
    $region48: #{sppf_forward.1} parent=5 // pred_fallthru
      _
  $region6: #{sppf_forward.1} parent=0 // loop_footer
    %s15 = sadd.s32 1, %s11
  $region7: #{sppf_forward.1} parent=0 // loop_footer_branch
    %10 = sbr.rel target = $region3
  $region8: #{sppf_forward.1} parent=0 // loop_exit
    _

</llo_original>
